<compile_context>
chip_gen: v7x
topology: tpu7x:2x2x1
jax: 0.10.0
libtpu: 0.0.40
codegen_flags: <defaults>
</compile_context>

<pallas_src>
import functools

import jax
import jax.numpy as jnp
from jax import lax
from jax.experimental import pallas as pl
from jax.experimental.pallas import tpu as pltpu


def _round_up(n, m):
    return ((n + m - 1) // m) * m


# ---------------------------------------------------------------------------
# Pallas kernel: whole sequence (recurrence + decoder) in one invocation.
# ---------------------------------------------------------------------------
def _char_gru_kernel(x_ref, wih_ref, bi_ref, whh_ref, bh_ref,
                     wdec_ref, bdec_ref, h0_ref,
                     out_ref, hfin_ref,
                     gi_scr, hs_scr):
    """
    x_ref    : (S*BP, HP)    bf16 time-major embedded inputs (batch padded to BP)
    wih_ref  : (HP, 3*HP)    bf16 fused input-to-hidden weights  [r | z | n]
    bi_ref   : (1, 3*HP)     f32 input biases; r/z blocks hold (b_ih + b_hh)
    whh_ref  : (HP, 3*HP)    bf16 fused hidden-to-hidden weights [r | z | n]
    bh_ref   : (1, 3*HP)     f32 hidden biases; zero for r/z, b_hn in the n block
    wdec_ref : (HP, OP)      bf16 transposed decoder weight (O padded to OP)
    bdec_ref : (1, OP)       f32 decoder bias
    h0_ref   : (BP, HP)      f32 initial hidden state
    out_ref  : (S*BP, OP)    f32 decoded outputs (time-major, lane-dense)
    hfin_ref : (BP, HP)      f32 final hidden state (lane-dense)
    gi_scr   : (S, BP, 3*HP) f32 scratch: hoisted per-step input projections
    hs_scr   : (S, BP, HP)   f32 scratch: per-step hidden states
    """
    S, BP, HP = hs_scr.shape
    SB = S * BP

    # Hoisted, h-independent input projection: ONE fused bf16 matmul with f32
    # accumulation (r/z biases already hold b_ih + b_hh, folded at prep time).
    gi = jnp.dot(x_ref[...], wih_ref[...], preferred_element_type=jnp.float32)
    gi_scr[...] = (gi + bi_ref[...]).reshape(S, BP, 3 * HP)

    whh = whh_ref[...]          # identical RHS reused back-to-back every step
    b_h = bh_ref[...]
    # TODO(synk): hold whh resident in the MXU across steps via
    # pltpu.matmul_push_rhs / matmul_acc_lhs / matmul_pop to remove the per-step
    # weight push from the serial chain entirely.

    def step(t, h):
        # ONE fused (BP, HP)@(HP, 3HP) h-dependent matmul per step; gate slices
        # below are 128-lane aligned (HP is a multiple of 128) and free.
        gh = jnp.dot(h.astype(whh.dtype), whh,
                     preferred_element_type=jnp.float32) + b_h
        gi_t = gi_scr[t]                               # leading-axis view (free)
        r = jax.nn.sigmoid(gi_t[:, :HP] + gh[:, :HP])
        z = jax.nn.sigmoid(gi_t[:, HP:2 * HP] + gh[:, HP:2 * HP])
        n = jnp.tanh(gi_t[:, 2 * HP:] + r * gh[:, 2 * HP:])
        h = (1.0 - z) * n + z * h                      # f32 carry / gate math
        hs_scr[t] = h
        return h

    h_fin = lax.fori_loop(0, S, step, h0_ref[...], unroll=True)
    hfin_ref[...] = h_fin

    # Decoder: ONE (S*BP, HP)@(HP, OP) matmul + single lane-dense writeback.
    hs = hs_scr[...].reshape(SB, HP).astype(wdec_ref.dtype)
    dec = jnp.dot(hs, wdec_ref[...], preferred_element_type=jnp.float32)
    out_ref[...] = dec + bdec_ref[...]
    # TODO(synk): at vocab-scale O on v7x, split the decoder into its own
    # O-tiled, double-buffered pallas_call with dimension_semantics=("parallel",)
    # so both TensorCores are used, and keep hs in bf16 to halve VMEM residency.


def _gru_decode_pallas(x, wih, b_i, whh, b_h, wdec, bdec, h0):
    SB, HP = x.shape
    BP = h0.shape[0]
    S = SB // BP
    GH = wih.shape[1]
    OP = wdec.shape[1]

    flops = 4 * SB * HP * GH + 2 * SB * HP * OP
    transcendentals = 3 * SB * HP
    in_bytes = sum(int(a.size) * a.dtype.itemsize
                   for a in (x, wih, b_i, whh, b_h, wdec, bdec, h0))
    out_bytes = SB * OP * 4 + BP * HP * 4
    scratch_bytes = S * BP * GH * 4 + S * BP * HP * 4
    vmem_limit = min(64 << 20,
                     max(32 << 20,
                         int(1.5 * (in_bytes + out_bytes)) + scratch_bytes + (4 << 20)))

    return pl.pallas_call(
        _char_gru_kernel,
        out_shape=(
            jax.ShapeDtypeStruct((SB, OP), jnp.float32),
            jax.ShapeDtypeStruct((BP, HP), jnp.float32),
        ),
        scratch_shapes=[
            pltpu.VMEM((S, BP, GH), jnp.float32),   # hoisted input projections
            pltpu.VMEM((S, BP, HP), jnp.float32),   # per-step hidden states
        ],
        compiler_params=pltpu.CompilerParams(vmem_limit_bytes=vmem_limit),
        cost_estimate=pl.CostEstimate(flops=flops,
                                      transcendentals=transcendentals,
                                      bytes_accessed=in_bytes + out_bytes),
    )(x, wih, b_i, whh, b_h, wdec, bdec, h0)


# ---------------------------------------------------------------------------
# Parameter initialization (deterministic, mimicking PyTorch shapes).
# ---------------------------------------------------------------------------
def init_char_rnn_params(key, input_size, hidden_size, output_size):
    k_emb, k_wih, k_whh, k_bih, k_bhh, k_wd, k_bd = jax.random.split(key, 7)
    bound = 1.0 / jnp.sqrt(hidden_size)
    return {
        # nn.Embedding(input_size, hidden_size): N(0, 1)
        "embedding": jax.random.normal(k_emb, (input_size, hidden_size), jnp.float32),
        # nn.GRU weights: (3H, H) / biases (3H,), uniform(-1/sqrt(H), 1/sqrt(H))
        "w_ih": jax.random.uniform(k_wih, (3 * hidden_size, hidden_size),
                                   jnp.float32, -bound, bound),
        "w_hh": jax.random.uniform(k_whh, (3 * hidden_size, hidden_size),
                                   jnp.float32, -bound, bound),
        "b_ih": jax.random.uniform(k_bih, (3 * hidden_size,), jnp.float32, -bound, bound),
        "b_hh": jax.random.uniform(k_bhh, (3 * hidden_size,), jnp.float32, -bound, bound),
        # nn.Linear(hidden_size, output_size)
        "w_dec": jax.random.uniform(k_wd, (output_size, hidden_size),
                                    jnp.float32, -bound, bound),
        "b_dec": jax.random.uniform(k_bd, (output_size,), jnp.float32, -bound, bound),
    }


def prepare_kernel_params(params):
    """One-time re-layout of parameters into the kernel's preferred format:
    fused (HP, 3HP) pre-transposed bf16 gate weights, lane-padded dims
    (H -> HP, O -> OP, multiples of 128), folded r/z biases.  Done outside the
    jitted forward so no per-call transposes/pads of the weights are paid."""
    H = params["w_hh"].shape[1]
    O = params["w_dec"].shape[0]
    HP = _round_up(H, 128)
    OP = _round_up(O, 128)

    w_ih = params["w_ih"].reshape(3, H, H)        # PyTorch gate order r, z, n
    w_hh = params["w_hh"].reshape(3, H, H)
    b_ih = params["b_ih"].reshape(3, H)
    b_hh = params["b_hh"].reshape(3, H)

    def fuse(w):                                   # (3, H_out, H_in) -> (HP, 3HP)
        wt = jnp.transpose(w, (0, 2, 1))           # (3, H_in, H_out)
        wt = jnp.pad(wt, ((0, 0), (0, HP - H), (0, HP - H)))
        return jnp.concatenate([wt[0], wt[1], wt[2]], axis=1)

    def pad_h(b):                                  # (H,) -> (HP,)
        return jnp.pad(b, (0, HP - H))

    return {
        # Embedding columns padded to HP (zeros; they meet zero weight rows).
        "embedding": jnp.pad(params["embedding"], ((0, 0), (0, HP - H))),
        "wih_all": fuse(w_ih).astype(jnp.bfloat16),            # (HP, 3HP)
        "whh_all": fuse(w_hh).astype(jnp.bfloat16),            # (HP, 3HP)
        # r/z gates use (b_ih + b_hh) jointly; n gate keeps b_in here ...
        "b_i": jnp.concatenate([pad_h(b_ih[0] + b_hh[0]),
                                pad_h(b_ih[1] + b_hh[1]),
                                pad_h(b_ih[2])])[None, :],      # (1, 3HP) f32
        # ... and b_hn rides with the h-projection (n block only: r*(h@Whn+b_hn)).
        "b_h": jnp.concatenate([jnp.zeros((HP,), jnp.float32),
                                jnp.zeros((HP,), jnp.float32),
                                pad_h(b_hh[2])])[None, :],      # (1, 3HP) f32
        "wdec_t": jnp.pad(params["w_dec"].T,
                          ((0, HP - H), (0, OP - O))).astype(jnp.bfloat16),  # (HP, OP)
        "b_dec": jnp.pad(params["b_dec"], (0, OP - O))[None, :],             # (1, OP)
    }


# ---------------------------------------------------------------------------
# Forward wrapper: matches CharRNN.forward(input, hidden) semantics.
#   input:  (B, S) int32 token ids
#   hidden: (n_layers=1, B, H) float32
# returns (output (B, S, O), hidden (1, B, H))
# ---------------------------------------------------------------------------
@functools.partial(jax.jit, static_argnames=("output_size",))
def char_rnn_forward(kparams, input_ids, hidden, *, output_size):
    B, S = input_ids.shape
    H = hidden.shape[-1]
    HP = kparams["wih_all"].shape[0]
    OP = kparams["wdec_t"].shape[1]
    BP = _round_up(max(B, 1), 8)                           # sublane-aligned batch

    # Embedding gather directly in time-major order (transpose the tiny id
    # matrix, not the activation tensor).
    # TODO(synk): at realistic H, fold this gather into the kernel via scalar-
    # prefetched ids + a manual DMA gather from an HBM-resident embedding table,
    # removing one full HBM round trip of the activations.
    x = kparams["embedding"][input_ids.T]                  # (S, B, HP) f32
    x = jnp.pad(x, ((0, 0), (0, BP - B), (0, 0)))          # (S, BP, HP)
    x = x.reshape(S * BP, HP).astype(jnp.bfloat16)         # bf16 MXU operand

    h0 = jnp.pad(hidden[0], ((0, BP - B), (0, HP - H)))    # (BP, HP) f32

    out_flat, h_fin = _gru_decode_pallas(
        x, kparams["wih_all"], kparams["b_i"], kparams["whh_all"],
        kparams["b_h"], kparams["wdec_t"], kparams["b_dec"], h0)

    out = out_flat.reshape(S, BP, OP)[:, :B, :output_size]
    output = jnp.transpose(out, (1, 0, 2))                 # (B, S, O) batch_first
    return output, h_fin[:B, :H][None]                     # hidden: (1, B, H)


# ---------------------------------------------------------------------------
# Pure-JAX reference (same math, raw PyTorch-layout params) for correctness.
# ---------------------------------------------------------------------------
def char_rnn_reference(params, input_ids, hidden):
    emb = params["embedding"][input_ids]
    H = params["w_hh"].shape[1]
    h = hidden[0]

    def step(h, x):
        gi = x @ params["w_ih"].T + params["b_ih"]
        gh = h @ params["w_hh"].T + params["b_hh"]
        i_r, i_z, i_n = gi[:, :H], gi[:, H:2 * H], gi[:, 2 * H:]
        h_r, h_z, h_n = gh[:, :H], gh[:, H:2 * H], gh[:, 2 * H:]
        r = jax.nn.sigmoid(i_r + h_r)
        z = jax.nn.sigmoid(i_z + h_z)
        n = jnp.tanh(i_n + r * h_n)
        h_new = (1.0 - z) * n + z * h
        return h_new, h_new

    h_fin, hs = jax.lax.scan(step, h, jnp.transpose(emb, (1, 0, 2)))
    out = jnp.transpose(hs, (1, 0, 2)) @ params["w_dec"].T + params["b_dec"]
    return out, h_fin[None]


if __name__ == "__main__":
    # Small shapes consistent with the module's forward contract.
    input_size = 16    # vocab size
    hidden_size = 32
    output_size = 16
    batch = 2
    seq = 8
    n_layers = 1

    key = jax.random.PRNGKey(0)
    k_params, k_ids = jax.random.split(key)
    params = init_char_rnn_params(k_params, input_size, hidden_size, output_size)
    kparams = prepare_kernel_params(params)

    input_ids = jax.random.randint(k_ids, (batch, seq), 0, input_size, jnp.int32)
    hidden0 = jnp.zeros((n_layers, batch, hidden_size), jnp.float32)  # init_hidden

    output, hidden = char_rnn_forward(kparams, input_ids, hidden0,
                                      output_size=output_size)
    jax.block_until_ready((output, hidden))

    # Verify against the pure-JAX reference.  The kernel uses bf16 MXU operands
    # (f32 accumulation / gate math), so tolerances are loosened accordingly.
    ref_out, ref_hidden = char_rnn_reference(params, input_ids, hidden0)
    assert output.shape == (batch, seq, output_size)
    assert hidden.shape == (n_layers, batch, hidden_size)
    assert jnp.allclose(output, ref_out, atol=5e-2, rtol=5e-2)
    assert jnp.allclose(hidden, ref_hidden, atol=5e-2, rtol=5e-2)

    print("KERNEL_OK")
</pallas_src>

<mosaic_0001>
module attributes {stable_mosaic.version = 11 : i64} {
  func.func @_char_gru_kernel(%arg0: memref<64x128xbf16, #tpu.memory_space<vmem>>, %arg1: memref<128x384xbf16, #tpu.memory_space<vmem>>, %arg2: memref<1x384xf32, #tpu.memory_space<vmem>>, %arg3: memref<128x384xbf16, #tpu.memory_space<vmem>>, %arg4: memref<1x384xf32, #tpu.memory_space<vmem>>, %arg5: memref<128x128xbf16, #tpu.memory_space<vmem>>, %arg6: memref<1x128xf32, #tpu.memory_space<vmem>>, %arg7: memref<8x128xf32, #tpu.memory_space<vmem>>, %arg8: memref<64x128xf32, #tpu.memory_space<vmem>>, %arg9: memref<8x128xf32, #tpu.memory_space<vmem>>, %arg10: memref<8x8x384xf32, #tpu.memory_space<vmem>>, %arg11: memref<8x8x128xf32, #tpu.memory_space<vmem>>) attributes {dimension_semantics = [], scalar_prefetch = 0 : i64, scratch_operands = 2 : i64, tpu.core_type = #tpu.core_type<tc>} {
    %c0 = arith.constant 0 : index
    %c0_0 = arith.constant 0 : index
    %0 = vector.load %arg0[%c0, %c0_0] : memref<64x128xbf16, #tpu.memory_space<vmem>>, vector<64x128xbf16>
    %c0_1 = arith.constant 0 : index
    %c0_2 = arith.constant 0 : index
    %1 = vector.load %arg1[%c0_1, %c0_2] : memref<128x384xbf16, #tpu.memory_space<vmem>>, vector<128x384xbf16>
    %cst = arith.constant dense<0.000000e+00> : vector<64x384xf32>
    %2 = tpu.matmul %0, %1, %cst {dimension_numbers = #tpu.dot_dimension_numbers<[1], [0], [0], [1], [0, 0, 1, 1], [], []>} : vector<64x128xbf16>, vector<128x384xbf16>, vector<64x384xf32> -> vector<64x384xf32>
    %c0_3 = arith.constant 0 : index
    %c0_4 = arith.constant 0 : index
    %3 = vector.load %arg2[%c0_3, %c0_4] : memref<1x384xf32, #tpu.memory_space<vmem>>, vector<1x384xf32>
    %4 = vector.broadcast %3 : vector<1x384xf32> to vector<64x384xf32>
    %5 = arith.addf %2, %4 : vector<64x384xf32>
    %6 = vector.shape_cast %5 : vector<64x384xf32> to vector<8x8x384xf32>
    %c0_5 = arith.constant 0 : index
    %c0_6 = arith.constant 0 : index
    %c0_7 = arith.constant 0 : index
    %7 = vector.load %arg10[%c0_5, %c0_6, %c0_7] : memref<8x8x384xf32, #tpu.memory_space<vmem>>, vector<8x8x384xf32>
    tpu.vector_store %arg10[%c0_5, %c0_6, %c0_7], %6 {strides = array<i32>} : memref<8x8x384xf32, #tpu.memory_space<vmem>>, vector<8x8x384xf32>,
    %c0_8 = arith.constant 0 : index
    %c0_9 = arith.constant 0 : index
    %8 = vector.load %arg3[%c0_8, %c0_9] : memref<128x384xbf16, #tpu.memory_space<vmem>>, vector<128x384xbf16>
    %c0_10 = arith.constant 0 : index
    %c0_11 = arith.constant 0 : index
    %9 = vector.load %arg4[%c0_10, %c0_11] : memref<1x384xf32, #tpu.memory_space<vmem>>, vector<1x384xf32>
    %c0_12 = arith.constant 0 : index
    %c0_13 = arith.constant 0 : index
    %10 = vector.load %arg7[%c0_12, %c0_13] : memref<8x128xf32, #tpu.memory_space<vmem>>, vector<8x128xf32>
    %c0_i32 = arith.constant 0 : i32
    %11 = arith.truncf %10 : vector<8x128xf32> to vector<8x128xbf16>
    %cst_14 = arith.constant dense<0.000000e+00> : vector<8x384xf32>
    %12 = tpu.matmul %11, %8, %cst_14 {dimension_numbers = #tpu.dot_dimension_numbers<[1], [0], [0], [1], [0, 0, 1, 1], [], []>} : vector<8x128xbf16>, vector<128x384xbf16>, vector<8x384xf32> -> vector<8x384xf32>
    %13 = vector.broadcast %9 : vector<1x384xf32> to vector<8x384xf32>
    %14 = arith.addf %12, %13 : vector<8x384xf32>
    %15 = arith.index_cast %c0_i32 : i32 to index
    %c0_15 = arith.constant 0 : index
    %c0_16 = arith.constant 0 : index
    %16 = vector.load %arg10[%15, %c0_15, %c0_16] : memref<8x8x384xf32, #tpu.memory_space<vmem>>, vector<1x8x384xf32>
    %17 = vector.shape_cast %16 : vector<1x8x384xf32> to vector<8x384xf32>
    %18 = vector.extract_strided_slice %17 {offsets = [0, 0], sizes = [8, 128], strides = [1, 1]} : vector<8x384xf32> to vector<8x128xf32>
    %19 = vector.extract_strided_slice %14 {offsets = [0, 0], sizes = [8, 128], strides = [1, 1]} : vector<8x384xf32> to vector<8x128xf32>
    %20 = arith.addf %18, %19 : vector<8x128xf32>
    %21 = arith.negf %20 : vector<8x128xf32>
    %22 = math.exp %21 : vector<8x128xf32>
    %cst_17 = arith.constant 1.000000e+00 : f32
    %23 = vector.broadcast %cst_17 : f32 to vector<8x128xf32>
    %24 = arith.addf %23, %22 : vector<8x128xf32>
    %25 = arith.divf %23, %24 : vector<8x128xf32>
    %26 = vector.extract_strided_slice %17 {offsets = [0, 128], sizes = [8, 128], strides = [1, 1]} : vector<8x384xf32> to vector<8x128xf32>
    %27 = vector.extract_strided_slice %14 {offsets = [0, 128], sizes = [8, 128], strides = [1, 1]} : vector<8x384xf32> to vector<8x128xf32>
    %28 = arith.addf %26, %27 : vector<8x128xf32>
    %29 = arith.negf %28 : vector<8x128xf32>
    %30 = math.exp %29 : vector<8x128xf32>
    %cst_18 = arith.constant 1.000000e+00 : f32
    %31 = vector.broadcast %cst_18 : f32 to vector<8x128xf32>
    %32 = arith.addf %31, %30 : vector<8x128xf32>
    %33 = arith.divf %31, %32 : vector<8x128xf32>
    %34 = vector.extract_strided_slice %17 {offsets = [0, 256], sizes = [8, 128], strides = [1, 1]} : vector<8x384xf32> to vector<8x128xf32>
    %35 = vector.extract_strided_slice %14 {offsets = [0, 256], sizes = [8, 128], strides = [1, 1]} : vector<8x384xf32> to vector<8x128xf32>
    %36 = arith.mulf %25, %35 : vector<8x128xf32>
    %37 = arith.addf %34, %36 : vector<8x128xf32>
    %38 = math.tanh %37 : vector<8x128xf32>
    %cst_19 = arith.constant 1.000000e+00 : f32
    %39 = vector.broadcast %cst_19 : f32 to vector<8x128xf32>
    %40 = arith.subf %39, %33 : vector<8x128xf32>
    %41 = arith.mulf %40, %38 : vector<8x128xf32>
    %42 = arith.mulf %33, %10 : vector<8x128xf32>
    %43 = arith.addf %41, %42 : vector<8x128xf32>
    %44 = arith.index_cast %c0_i32 : i32 to index
    %c0_20 = arith.constant 0 : index
    %c0_21 = arith.constant 0 : index
    %45 = vector.load %arg11[%44, %c0_20, %c0_21] : memref<8x8x128xf32, #tpu.memory_space<vmem>>, vector<1x8x128xf32>
    %46 = vector.shape_cast %45 : vector<1x8x128xf32> to vector<8x128xf32>
    %47 = vector.shape_cast %43 : vector<8x128xf32> to vector<1x8x128xf32>
    tpu.vector_store %arg11[%44, %c0_20, %c0_21], %47 {strides = array<i32>} : memref<8x8x128xf32, #tpu.memory_space<vmem>>, vector<1x8x128xf32>,
    %c1_i32 = arith.constant 1 : i32
    %48 = arith.truncf %43 : vector<8x128xf32> to vector<8x128xbf16>
    %cst_22 = arith.constant dense<0.000000e+00> : vector<8x384xf32>
    %49 = tpu.matmul %48, %8, %cst_22 {dimension_numbers = #tpu.dot_dimension_numbers<[1], [0], [0], [1], [0, 0, 1, 1], [], []>} : vector<8x128xbf16>, vector<128x384xbf16>, vector<8x384xf32> -> vector<8x384xf32>
    %50 = vector.broadcast %9 : vector<1x384xf32> to vector<8x384xf32>
    %51 = arith.addf %49, %50 : vector<8x384xf32>
    %52 = arith.index_cast %c1_i32 : i32 to index
    %c0_23 = arith.constant 0 : index
    %c0_24 = arith.constant 0 : index
    %53 = vector.load %arg10[%52, %c0_23, %c0_24] : memref<8x8x384xf32, #tpu.memory_space<vmem>>, vector<1x8x384xf32>
    %54 = vector.shape_cast %53 : vector<1x8x384xf32> to vector<8x384xf32>
    %55 = vector.extract_strided_slice %54 {offsets = [0, 0], sizes = [8, 128], strides = [1, 1]} : vector<8x384xf32> to vector<8x128xf32>
    %56 = vector.extract_strided_slice %51 {offsets = [0, 0], sizes = [8, 128], strides = [1, 1]} : vector<8x384xf32> to vector<8x128xf32>
    %57 = arith.addf %55, %56 : vector<8x128xf32>
    %58 = arith.negf %57 : vector<8x128xf32>
    %59 = math.exp %58 : vector<8x128xf32>
    %cst_25 = arith.constant 1.000000e+00 : f32
    %60 = vector.broadcast %cst_25 : f32 to vector<8x128xf32>
    %61 = arith.addf %60, %59 : vector<8x128xf32>
    %62 = arith.divf %60, %61 : vector<8x128xf32>
    %63 = vector.extract_strided_slice %54 {offsets = [0, 128], sizes = [8, 128], strides = [1, 1]} : vector<8x384xf32> to vector<8x128xf32>
    %64 = vector.extract_strided_slice %51 {offsets = [0, 128], sizes = [8, 128], strides = [1, 1]} : vector<8x384xf32> to vector<8x128xf32>
    %65 = arith.addf %63, %64 : vector<8x128xf32>
    %66 = arith.negf %65 : vector<8x128xf32>
    %67 = math.exp %66 : vector<8x128xf32>
    %cst_26 = arith.constant 1.000000e+00 : f32
    %68 = vector.broadcast %cst_26 : f32 to vector<8x128xf32>
    %69 = arith.addf %68, %67 : vector<8x128xf32>
    %70 = arith.divf %68, %69 : vector<8x128xf32>
    %71 = vector.extract_strided_slice %54 {offsets = [0, 256], sizes = [8, 128], strides = [1, 1]} : vector<8x384xf32> to vector<8x128xf32>
    %72 = vector.extract_strided_slice %51 {offsets = [0, 256], sizes = [8, 128], strides = [1, 1]} : vector<8x384xf32> to vector<8x128xf32>
    %73 = arith.mulf %62, %72 : vector<8x128xf32>
    %74 = arith.addf %71, %73 : vector<8x128xf32>
    %75 = math.tanh %74 : vector<8x128xf32>
    %cst_27 = arith.constant 1.000000e+00 : f32
    %76 = vector.broadcast %cst_27 : f32 to vector<8x128xf32>
    %77 = arith.subf %76, %70 : vector<8x128xf32>
    %78 = arith.mulf %77, %75 : vector<8x128xf32>
    %79 = arith.mulf %70, %43 : vector<8x128xf32>
    %80 = arith.addf %78, %79 : vector<8x128xf32>
    %81 = arith.index_cast %c1_i32 : i32 to index
    %c0_28 = arith.constant 0 : index
    %c0_29 = arith.constant 0 : index
    %82 = vector.load %arg11[%81, %c0_28, %c0_29] : memref<8x8x128xf32, #tpu.memory_space<vmem>>, vector<1x8x128xf32>
    %83 = vector.shape_cast %82 : vector<1x8x128xf32> to vector<8x128xf32>
    %84 = vector.shape_cast %80 : vector<8x128xf32> to vector<1x8x128xf32>
    tpu.vector_store %arg11[%81, %c0_28, %c0_29], %84 {strides = array<i32>} : memref<8x8x128xf32, #tpu.memory_space<vmem>>, vector<1x8x128xf32>,
    %c2_i32 = arith.constant 2 : i32
    %85 = arith.truncf %80 : vector<8x128xf32> to vector<8x128xbf16>
    %cst_30 = arith.constant dense<0.000000e+00> : vector<8x384xf32>
    %86 = tpu.matmul %85, %8, %cst_30 {dimension_numbers = #tpu.dot_dimension_numbers<[1], [0], [0], [1], [0, 0, 1, 1], [], []>} : vector<8x128xbf16>, vector<128x384xbf16>, vector<8x384xf32> -> vector<8x384xf32>
    %87 = vector.broadcast %9 : vector<1x384xf32> to vector<8x384xf32>
    %88 = arith.addf %86, %87 : vector<8x384xf32>
    %89 = arith.index_cast %c2_i32 : i32 to index
    %c0_31 = arith.constant 0 : index
    %c0_32 = arith.constant 0 : index
    %90 = vector.load %arg10[%89, %c0_31, %c0_32] : memref<8x8x384xf32, #tpu.memory_space<vmem>>, vector<1x8x384xf32>
    %91 = vector.shape_cast %90 : vector<1x8x384xf32> to vector<8x384xf32>
    %92 = vector.extract_strided_slice %91 {offsets = [0, 0], sizes = [8, 128], strides = [1, 1]} : vector<8x384xf32> to vector<8x128xf32>
    %93 = vector.extract_strided_slice %88 {offsets = [0, 0], sizes = [8, 128], strides = [1, 1]} : vector<8x384xf32> to vector<8x128xf32>
    %94 = arith.addf %92, %93 : vector<8x128xf32>
    %95 = arith.negf %94 : vector<8x128xf32>
    %96 = math.exp %95 : vector<8x128xf32>
    %cst_33 = arith.constant 1.000000e+00 : f32
    %97 = vector.broadcast %cst_33 : f32 to vector<8x128xf32>
    %98 = arith.addf %97, %96 : vector<8x128xf32>
    %99 = arith.divf %97, %98 : vector<8x128xf32>
    %100 = vector.extract_strided_slice %91 {offsets = [0, 128], sizes = [8, 128], strides = [1, 1]} : vector<8x384xf32> to vector<8x128xf32>
    %101 = vector.extract_strided_slice %88 {offsets = [0, 128], sizes = [8, 128], strides = [1, 1]} : vector<8x384xf32> to vector<8x128xf32>
    %102 = arith.addf %100, %101 : vector<8x128xf32>
    %103 = arith.negf %102 : vector<8x128xf32>
    %104 = math.exp %103 : vector<8x128xf32>
    %cst_34 = arith.constant 1.000000e+00 : f32
    %105 = vector.broadcast %cst_34 : f32 to vector<8x128xf32>
    %106 = arith.addf %105, %104 : vector<8x128xf32>
    %107 = arith.divf %105, %106 : vector<8x128xf32>
    %108 = vector.extract_strided_slice %91 {offsets = [0, 256], sizes = [8, 128], strides = [1, 1]} : vector<8x384xf32> to vector<8x128xf32>
    %109 = vector.extract_strided_slice %88 {offsets = [0, 256], sizes = [8, 128], strides = [1, 1]} : vector<8x384xf32> to vector<8x128xf32>
    %110 = arith.mulf %99, %109 : vector<8x128xf32>
    %111 = arith.addf %108, %110 : vector<8x128xf32>
    %112 = math.tanh %111 : vector<8x128xf32>
    %cst_35 = arith.constant 1.000000e+00 : f32
    %113 = vector.broadcast %cst_35 : f32 to vector<8x128xf32>
    %114 = arith.subf %113, %107 : vector<8x128xf32>
    %115 = arith.mulf %114, %112 : vector<8x128xf32>
    %116 = arith.mulf %107, %80 : vector<8x128xf32>
    %117 = arith.addf %115, %116 : vector<8x128xf32>
    %118 = arith.index_cast %c2_i32 : i32 to index
    %c0_36 = arith.constant 0 : index
    %c0_37 = arith.constant 0 : index
    %119 = vector.load %arg11[%118, %c0_36, %c0_37] : memref<8x8x128xf32, #tpu.memory_space<vmem>>, vector<1x8x128xf32>
    %120 = vector.shape_cast %119 : vector<1x8x128xf32> to vector<8x128xf32>
    %121 = vector.shape_cast %117 : vector<8x128xf32> to vector<1x8x128xf32>
    tpu.vector_store %arg11[%118, %c0_36, %c0_37], %121 {strides = array<i32>} : memref<8x8x128xf32, #tpu.memory_space<vmem>>, vector<1x8x128xf32>,
    %c3_i32 = arith.constant 3 : i32
    %122 = arith.truncf %117 : vector<8x128xf32> to vector<8x128xbf16>
    %cst_38 = arith.constant dense<0.000000e+00> : vector<8x384xf32>
    %123 = tpu.matmul %122, %8, %cst_38 {dimension_numbers = #tpu.dot_dimension_numbers<[1], [0], [0], [1], [0, 0, 1, 1], [], []>} : vector<8x128xbf16>, vector<128x384xbf16>, vector<8x384xf32> -> vector<8x384xf32>
    %124 = vector.broadcast %9 : vector<1x384xf32> to vector<8x384xf32>
    %125 = arith.addf %123, %124 : vector<8x384xf32>
    %126 = arith.index_cast %c3_i32 : i32 to index
    %c0_39 = arith.constant 0 : index
    %c0_40 = arith.constant 0 : index
    %127 = vector.load %arg10[%126, %c0_39, %c0_40] : memref<8x8x384xf32, #tpu.memory_space<vmem>>, vector<1x8x384xf32>
    %128 = vector.shape_cast %127 : vector<1x8x384xf32> to vector<8x384xf32>
    %129 = vector.extract_strided_slice %128 {offsets = [0, 0], sizes = [8, 128], strides = [1, 1]} : vector<8x384xf32> to vector<8x128xf32>
    %130 = vector.extract_strided_slice %125 {offsets = [0, 0], sizes = [8, 128], strides = [1, 1]} : vector<8x384xf32> to vector<8x128xf32>
    %131 = arith.addf %129, %130 : vector<8x128xf32>
    %132 = arith.negf %131 : vector<8x128xf32>
    %133 = math.exp %132 : vector<8x128xf32>
    %cst_41 = arith.constant 1.000000e+00 : f32
    %134 = vector.broadcast %cst_41 : f32 to vector<8x128xf32>
    %135 = arith.addf %134, %133 : vector<8x128xf32>
    %136 = arith.divf %134, %135 : vector<8x128xf32>
    %137 = vector.extract_strided_slice %128 {offsets = [0, 128], sizes = [8, 128], strides = [1, 1]} : vector<8x384xf32> to vector<8x128xf32>
    %138 = vector.extract_strided_slice %125 {offsets = [0, 128], sizes = [8, 128], strides = [1, 1]} : vector<8x384xf32> to vector<8x128xf32>
    %139 = arith.addf %137, %138 : vector<8x128xf32>
    %140 = arith.negf %139 : vector<8x128xf32>
    %141 = math.exp %140 : vector<8x128xf32>
    %cst_42 = arith.constant 1.000000e+00 : f32
    %142 = vector.broadcast %cst_42 : f32 to vector<8x128xf32>
    %143 = arith.addf %142, %141 : vector<8x128xf32>
    %144 = arith.divf %142, %143 : vector<8x128xf32>
    %145 = vector.extract_strided_slice %128 {offsets = [0, 256], sizes = [8, 128], strides = [1, 1]} : vector<8x384xf32> to vector<8x128xf32>
    %146 = vector.extract_strided_slice %125 {offsets = [0, 256], sizes = [8, 128], strides = [1, 1]} : vector<8x384xf32> to vector<8x128xf32>
    %147 = arith.mulf %136, %146 : vector<8x128xf32>
    %148 = arith.addf %145, %147 : vector<8x128xf32>
    %149 = math.tanh %148 : vector<8x128xf32>
    %cst_43 = arith.constant 1.000000e+00 : f32
    %150 = vector.broadcast %cst_43 : f32 to vector<8x128xf32>
    %151 = arith.subf %150, %144 : vector<8x128xf32>
    %152 = arith.mulf %151, %149 : vector<8x128xf32>
    %153 = arith.mulf %144, %117 : vector<8x128xf32>
    %154 = arith.addf %152, %153 : vector<8x128xf32>
    %155 = arith.index_cast %c3_i32 : i32 to index
    %c0_44 = arith.constant 0 : index
    %c0_45 = arith.constant 0 : index
    %156 = vector.load %arg11[%155, %c0_44, %c0_45] : memref<8x8x128xf32, #tpu.memory_space<vmem>>, vector<1x8x128xf32>
    %157 = vector.shape_cast %156 : vector<1x8x128xf32> to vector<8x128xf32>
    %158 = vector.shape_cast %154 : vector<8x128xf32> to vector<1x8x128xf32>
    tpu.vector_store %arg11[%155, %c0_44, %c0_45], %158 {strides = array<i32>} : memref<8x8x128xf32, #tpu.memory_space<vmem>>, vector<1x8x128xf32>,
    %c4_i32 = arith.constant 4 : i32
    %159 = arith.truncf %154 : vector<8x128xf32> to vector<8x128xbf16>
    %cst_46 = arith.constant dense<0.000000e+00> : vector<8x384xf32>
    %160 = tpu.matmul %159, %8, %cst_46 {dimension_numbers = #tpu.dot_dimension_numbers<[1], [0], [0], [1], [0, 0, 1, 1], [], []>} : vector<8x128xbf16>, vector<128x384xbf16>, vector<8x384xf32> -> vector<8x384xf32>
    %161 = vector.broadcast %9 : vector<1x384xf32> to vector<8x384xf32>
    %162 = arith.addf %160, %161 : vector<8x384xf32>
    %163 = arith.index_cast %c4_i32 : i32 to index
    %c0_47 = arith.constant 0 : index
    %c0_48 = arith.constant 0 : index
    %164 = vector.load %arg10[%163, %c0_47, %c0_48] : memref<8x8x384xf32, #tpu.memory_space<vmem>>, vector<1x8x384xf32>
    %165 = vector.shape_cast %164 : vector<1x8x384xf32> to vector<8x384xf32>
    %166 = vector.extract_strided_slice %165 {offsets = [0, 0], sizes = [8, 128], strides = [1, 1]} : vector<8x384xf32> to vector<8x128xf32>
    %167 = vector.extract_strided_slice %162 {offsets = [0, 0], sizes = [8, 128], strides = [1, 1]} : vector<8x384xf32> to vector<8x128xf32>
    %168 = arith.addf %166, %167 : vector<8x128xf32>
    %169 = arith.negf %168 : vector<8x128xf32>
    %170 = math.exp %169 : vector<8x128xf32>
    %cst_49 = arith.constant 1.000000e+00 : f32
    %171 = vector.broadcast %cst_49 : f32 to vector<8x128xf32>
    %172 = arith.addf %171, %170 : vector<8x128xf32>
    %173 = arith.divf %171, %172 : vector<8x128xf32>
    %174 = vector.extract_strided_slice %165 {offsets = [0, 128], sizes = [8, 128], strides = [1, 1]} : vector<8x384xf32> to vector<8x128xf32>
    %175 = vector.extract_strided_slice %162 {offsets = [0, 128], sizes = [8, 128], strides = [1, 1]} : vector<8x384xf32> to vector<8x128xf32>
    %176 = arith.addf %174, %175 : vector<8x128xf32>
    %177 = arith.negf %176 : vector<8x128xf32>
    %178 = math.exp %177 : vector<8x128xf32>
    %cst_50 = arith.constant 1.000000e+00 : f32
    %179 = vector.broadcast %cst_50 : f32 to vector<8x128xf32>
    %180 = arith.addf %179, %178 : vector<8x128xf32>
    %181 = arith.divf %179, %180 : vector<8x128xf32>
    %182 = vector.extract_strided_slice %165 {offsets = [0, 256], sizes = [8, 128], strides = [1, 1]} : vector<8x384xf32> to vector<8x128xf32>
    %183 = vector.extract_strided_slice %162 {offsets = [0, 256], sizes = [8, 128], strides = [1, 1]} : vector<8x384xf32> to vector<8x128xf32>
    %184 = arith.mulf %173, %183 : vector<8x128xf32>
    %185 = arith.addf %182, %184 : vector<8x128xf32>
    %186 = math.tanh %185 : vector<8x128xf32>
    %cst_51 = arith.constant 1.000000e+00 : f32
    %187 = vector.broadcast %cst_51 : f32 to vector<8x128xf32>
    %188 = arith.subf %187, %181 : vector<8x128xf32>
    %189 = arith.mulf %188, %186 : vector<8x128xf32>
    %190 = arith.mulf %181, %154 : vector<8x128xf32>
    %191 = arith.addf %189, %190 : vector<8x128xf32>
    %192 = arith.index_cast %c4_i32 : i32 to index
    %c0_52 = arith.constant 0 : index
    %c0_53 = arith.constant 0 : index
    %193 = vector.load %arg11[%192, %c0_52, %c0_53] : memref<8x8x128xf32, #tpu.memory_space<vmem>>, vector<1x8x128xf32>
    %194 = vector.shape_cast %193 : vector<1x8x128xf32> to vector<8x128xf32>
    %195 = vector.shape_cast %191 : vector<8x128xf32> to vector<1x8x128xf32>
    tpu.vector_store %arg11[%192, %c0_52, %c0_53], %195 {strides = array<i32>} : memref<8x8x128xf32, #tpu.memory_space<vmem>>, vector<1x8x128xf32>,
    %c5_i32 = arith.constant 5 : i32
    %196 = arith.truncf %191 : vector<8x128xf32> to vector<8x128xbf16>
    %cst_54 = arith.constant dense<0.000000e+00> : vector<8x384xf32>
    %197 = tpu.matmul %196, %8, %cst_54 {dimension_numbers = #tpu.dot_dimension_numbers<[1], [0], [0], [1], [0, 0, 1, 1], [], []>} : vector<8x128xbf16>, vector<128x384xbf16>, vector<8x384xf32> -> vector<8x384xf32>
    %198 = vector.broadcast %9 : vector<1x384xf32> to vector<8x384xf32>
    %199 = arith.addf %197, %198 : vector<8x384xf32>
    %200 = arith.index_cast %c5_i32 : i32 to index
    %c0_55 = arith.constant 0 : index
    %c0_56 = arith.constant 0 : index
    %201 = vector.load %arg10[%200, %c0_55, %c0_56] : memref<8x8x384xf32, #tpu.memory_space<vmem>>, vector<1x8x384xf32>
    %202 = vector.shape_cast %201 : vector<1x8x384xf32> to vector<8x384xf32>
    %203 = vector.extract_strided_slice %202 {offsets = [0, 0], sizes = [8, 128], strides = [1, 1]} : vector<8x384xf32> to vector<8x128xf32>
    %204 = vector.extract_strided_slice %199 {offsets = [0, 0], sizes = [8, 128], strides = [1, 1]} : vector<8x384xf32> to vector<8x128xf32>
    %205 = arith.addf %203, %204 : vector<8x128xf32>
    %206 = arith.negf %205 : vector<8x128xf32>
    %207 = math.exp %206 : vector<8x128xf32>
    %cst_57 = arith.constant 1.000000e+00 : f32
    %208 = vector.broadcast %cst_57 : f32 to vector<8x128xf32>
    %209 = arith.addf %208, %207 : vector<8x128xf32>
    %210 = arith.divf %208, %209 : vector<8x128xf32>
    %211 = vector.extract_strided_slice %202 {offsets = [0, 128], sizes = [8, 128], strides = [1, 1]} : vector<8x384xf32> to vector<8x128xf32>
    %212 = vector.extract_strided_slice %199 {offsets = [0, 128], sizes = [8, 128], strides = [1, 1]} : vector<8x384xf32> to vector<8x128xf32>
    %213 = arith.addf %211, %212 : vector<8x128xf32>
    %214 = arith.negf %213 : vector<8x128xf32>
    %215 = math.exp %214 : vector<8x128xf32>
    %cst_58 = arith.constant 1.000000e+00 : f32
    %216 = vector.broadcast %cst_58 : f32 to vector<8x128xf32>
    %217 = arith.addf %216, %215 : vector<8x128xf32>
    %218 = arith.divf %216, %217 : vector<8x128xf32>
    %219 = vector.extract_strided_slice %202 {offsets = [0, 256], sizes = [8, 128], strides = [1, 1]} : vector<8x384xf32> to vector<8x128xf32>
    %220 = vector.extract_strided_slice %199 {offsets = [0, 256], sizes = [8, 128], strides = [1, 1]} : vector<8x384xf32> to vector<8x128xf32>
    %221 = arith.mulf %210, %220 : vector<8x128xf32>
    %222 = arith.addf %219, %221 : vector<8x128xf32>
    %223 = math.tanh %222 : vector<8x128xf32>
    %cst_59 = arith.constant 1.000000e+00 : f32
    %224 = vector.broadcast %cst_59 : f32 to vector<8x128xf32>
    %225 = arith.subf %224, %218 : vector<8x128xf32>
    %226 = arith.mulf %225, %223 : vector<8x128xf32>
    %227 = arith.mulf %218, %191 : vector<8x128xf32>
    %228 = arith.addf %226, %227 : vector<8x128xf32>
    %229 = arith.index_cast %c5_i32 : i32 to index
    %c0_60 = arith.constant 0 : index
    %c0_61 = arith.constant 0 : index
    %230 = vector.load %arg11[%229, %c0_60, %c0_61] : memref<8x8x128xf32, #tpu.memory_space<vmem>>, vector<1x8x128xf32>
    %231 = vector.shape_cast %230 : vector<1x8x128xf32> to vector<8x128xf32>
    %232 = vector.shape_cast %228 : vector<8x128xf32> to vector<1x8x128xf32>
    tpu.vector_store %arg11[%229, %c0_60, %c0_61], %232 {strides = array<i32>} : memref<8x8x128xf32, #tpu.memory_space<vmem>>, vector<1x8x128xf32>,
    %c6_i32 = arith.constant 6 : i32
    %233 = arith.truncf %228 : vector<8x128xf32> to vector<8x128xbf16>
    %cst_62 = arith.constant dense<0.000000e+00> : vector<8x384xf32>
    %234 = tpu.matmul %233, %8, %cst_62 {dimension_numbers = #tpu.dot_dimension_numbers<[1], [0], [0], [1], [0, 0, 1, 1], [], []>} : vector<8x128xbf16>, vector<128x384xbf16>, vector<8x384xf32> -> vector<8x384xf32>
    %235 = vector.broadcast %9 : vector<1x384xf32> to vector<8x384xf32>
    %236 = arith.addf %234, %235 : vector<8x384xf32>
    %237 = arith.index_cast %c6_i32 : i32 to index
    %c0_63 = arith.constant 0 : index
    %c0_64 = arith.constant 0 : index
    %238 = vector.load %arg10[%237, %c0_63, %c0_64] : memref<8x8x384xf32, #tpu.memory_space<vmem>>, vector<1x8x384xf32>
    %239 = vector.shape_cast %238 : vector<1x8x384xf32> to vector<8x384xf32>
    %240 = vector.extract_strided_slice %239 {offsets = [0, 0], sizes = [8, 128], strides = [1, 1]} : vector<8x384xf32> to vector<8x128xf32>
    %241 = vector.extract_strided_slice %236 {offsets = [0, 0], sizes = [8, 128], strides = [1, 1]} : vector<8x384xf32> to vector<8x128xf32>
    %242 = arith.addf %240, %241 : vector<8x128xf32>
    %243 = arith.negf %242 : vector<8x128xf32>
    %244 = math.exp %243 : vector<8x128xf32>
    %cst_65 = arith.constant 1.000000e+00 : f32
    %245 = vector.broadcast %cst_65 : f32 to vector<8x128xf32>
    %246 = arith.addf %245, %244 : vector<8x128xf32>
    %247 = arith.divf %245, %246 : vector<8x128xf32>
    %248 = vector.extract_strided_slice %239 {offsets = [0, 128], sizes = [8, 128], strides = [1, 1]} : vector<8x384xf32> to vector<8x128xf32>
    %249 = vector.extract_strided_slice %236 {offsets = [0, 128], sizes = [8, 128], strides = [1, 1]} : vector<8x384xf32> to vector<8x128xf32>
    %250 = arith.addf %248, %249 : vector<8x128xf32>
    %251 = arith.negf %250 : vector<8x128xf32>
    %252 = math.exp %251 : vector<8x128xf32>
    %cst_66 = arith.constant 1.000000e+00 : f32
    %253 = vector.broadcast %cst_66 : f32 to vector<8x128xf32>
    %254 = arith.addf %253, %252 : vector<8x128xf32>
    %255 = arith.divf %253, %254 : vector<8x128xf32>
    %256 = vector.extract_strided_slice %239 {offsets = [0, 256], sizes = [8, 128], strides = [1, 1]} : vector<8x384xf32> to vector<8x128xf32>
    %257 = vector.extract_strided_slice %236 {offsets = [0, 256], sizes = [8, 128], strides = [1, 1]} : vector<8x384xf32> to vector<8x128xf32>
    %258 = arith.mulf %247, %257 : vector<8x128xf32>
    %259 = arith.addf %256, %258 : vector<8x128xf32>
    %260 = math.tanh %259 : vector<8x128xf32>
    %cst_67 = arith.constant 1.000000e+00 : f32
    %261 = vector.broadcast %cst_67 : f32 to vector<8x128xf32>
    %262 = arith.subf %261, %255 : vector<8x128xf32>
    %263 = arith.mulf %262, %260 : vector<8x128xf32>
    %264 = arith.mulf %255, %228 : vector<8x128xf32>
    %265 = arith.addf %263, %264 : vector<8x128xf32>
    %266 = arith.index_cast %c6_i32 : i32 to index
    %c0_68 = arith.constant 0 : index
    %c0_69 = arith.constant 0 : index
    %267 = vector.load %arg11[%266, %c0_68, %c0_69] : memref<8x8x128xf32, #tpu.memory_space<vmem>>, vector<1x8x128xf32>
    %268 = vector.shape_cast %267 : vector<1x8x128xf32> to vector<8x128xf32>
    %269 = vector.shape_cast %265 : vector<8x128xf32> to vector<1x8x128xf32>
    tpu.vector_store %arg11[%266, %c0_68, %c0_69], %269 {strides = array<i32>} : memref<8x8x128xf32, #tpu.memory_space<vmem>>, vector<1x8x128xf32>,
    %c7_i32 = arith.constant 7 : i32
    %270 = arith.truncf %265 : vector<8x128xf32> to vector<8x128xbf16>
    %cst_70 = arith.constant dense<0.000000e+00> : vector<8x384xf32>
    %271 = tpu.matmul %270, %8, %cst_70 {dimension_numbers = #tpu.dot_dimension_numbers<[1], [0], [0], [1], [0, 0, 1, 1], [], []>} : vector<8x128xbf16>, vector<128x384xbf16>, vector<8x384xf32> -> vector<8x384xf32>
    %272 = vector.broadcast %9 : vector<1x384xf32> to vector<8x384xf32>
    %273 = arith.addf %271, %272 : vector<8x384xf32>
    %274 = arith.index_cast %c7_i32 : i32 to index
    %c0_71 = arith.constant 0 : index
    %c0_72 = arith.constant 0 : index
    %275 = vector.load %arg10[%274, %c0_71, %c0_72] : memref<8x8x384xf32, #tpu.memory_space<vmem>>, vector<1x8x384xf32>
    %276 = vector.shape_cast %275 : vector<1x8x384xf32> to vector<8x384xf32>
    %277 = vector.extract_strided_slice %276 {offsets = [0, 0], sizes = [8, 128], strides = [1, 1]} : vector<8x384xf32> to vector<8x128xf32>
    %278 = vector.extract_strided_slice %273 {offsets = [0, 0], sizes = [8, 128], strides = [1, 1]} : vector<8x384xf32> to vector<8x128xf32>
    %279 = arith.addf %277, %278 : vector<8x128xf32>
    %280 = arith.negf %279 : vector<8x128xf32>
    %281 = math.exp %280 : vector<8x128xf32>
    %cst_73 = arith.constant 1.000000e+00 : f32
    %282 = vector.broadcast %cst_73 : f32 to vector<8x128xf32>
    %283 = arith.addf %282, %281 : vector<8x128xf32>
    %284 = arith.divf %282, %283 : vector<8x128xf32>
    %285 = vector.extract_strided_slice %276 {offsets = [0, 128], sizes = [8, 128], strides = [1, 1]} : vector<8x384xf32> to vector<8x128xf32>
    %286 = vector.extract_strided_slice %273 {offsets = [0, 128], sizes = [8, 128], strides = [1, 1]} : vector<8x384xf32> to vector<8x128xf32>
    %287 = arith.addf %285, %286 : vector<8x128xf32>
    %288 = arith.negf %287 : vector<8x128xf32>
    %289 = math.exp %288 : vector<8x128xf32>
    %cst_74 = arith.constant 1.000000e+00 : f32
    %290 = vector.broadcast %cst_74 : f32 to vector<8x128xf32>
    %291 = arith.addf %290, %289 : vector<8x128xf32>
    %292 = arith.divf %290, %291 : vector<8x128xf32>
    %293 = vector.extract_strided_slice %276 {offsets = [0, 256], sizes = [8, 128], strides = [1, 1]} : vector<8x384xf32> to vector<8x128xf32>
    %294 = vector.extract_strided_slice %273 {offsets = [0, 256], sizes = [8, 128], strides = [1, 1]} : vector<8x384xf32> to vector<8x128xf32>
    %295 = arith.mulf %284, %294 : vector<8x128xf32>
    %296 = arith.addf %293, %295 : vector<8x128xf32>
    %297 = math.tanh %296 : vector<8x128xf32>
    %cst_75 = arith.constant 1.000000e+00 : f32
    %298 = vector.broadcast %cst_75 : f32 to vector<8x128xf32>
    %299 = arith.subf %298, %292 : vector<8x128xf32>
    %300 = arith.mulf %299, %297 : vector<8x128xf32>
    %301 = arith.mulf %292, %265 : vector<8x128xf32>
    %302 = arith.addf %300, %301 : vector<8x128xf32>
    %303 = arith.index_cast %c7_i32 : i32 to index
    %c0_76 = arith.constant 0 : index
    %c0_77 = arith.constant 0 : index
    %304 = vector.load %arg11[%303, %c0_76, %c0_77] : memref<8x8x128xf32, #tpu.memory_space<vmem>>, vector<1x8x128xf32>
    %305 = vector.shape_cast %304 : vector<1x8x128xf32> to vector<8x128xf32>
    %306 = vector.shape_cast %302 : vector<8x128xf32> to vector<1x8x128xf32>
    tpu.vector_store %arg11[%303, %c0_76, %c0_77], %306 {strides = array<i32>} : memref<8x8x128xf32, #tpu.memory_space<vmem>>, vector<1x8x128xf32>,
    %c8_i32 = arith.constant 8 : i32
    %c0_78 = arith.constant 0 : index
    %c0_79 = arith.constant 0 : index
    %307 = vector.load %arg9[%c0_78, %c0_79] : memref<8x128xf32, #tpu.memory_space<vmem>>, vector<8x128xf32>
    tpu.vector_store %arg9[%c0_78, %c0_79], %302 {strides = array<i32>} : memref<8x128xf32, #tpu.memory_space<vmem>>, vector<8x128xf32>,
    %c0_80 = arith.constant 0 : index
    %c0_81 = arith.constant 0 : index
    %c0_82 = arith.constant 0 : index
    %308 = vector.load %arg11[%c0_80, %c0_81, %c0_82] : memref<8x8x128xf32, #tpu.memory_space<vmem>>, vector<8x8x128xf32>
    %309 = vector.shape_cast %308 : vector<8x8x128xf32> to vector<64x128xf32>
    %310 = arith.truncf %309 : vector<64x128xf32> to vector<64x128xbf16>
    %c0_83 = arith.constant 0 : index
    %c0_84 = arith.constant 0 : index
    %311 = vector.load %arg5[%c0_83, %c0_84] : memref<128x128xbf16, #tpu.memory_space<vmem>>, vector<128x128xbf16>
    %cst_85 = arith.constant dense<0.000000e+00> : vector<64x128xf32>
    %312 = tpu.matmul %310, %311, %cst_85 {dimension_numbers = #tpu.dot_dimension_numbers<[1], [0], [0], [1], [0, 0, 1, 1], [], []>} : vector<64x128xbf16>, vector<128x128xbf16>, vector<64x128xf32> -> vector<64x128xf32>
    %c0_86 = arith.constant 0 : index
    %c0_87 = arith.constant 0 : index
    %313 = vector.load %arg6[%c0_86, %c0_87] : memref<1x128xf32, #tpu.memory_space<vmem>>, vector<1x128xf32>
    %314 = vector.broadcast %313 : vector<1x128xf32> to vector<64x128xf32>
    %315 = arith.addf %312, %314 : vector<64x128xf32>
    %c0_88 = arith.constant 0 : index
    %c0_89 = arith.constant 0 : index
    %316 = vector.load %arg8[%c0_88, %c0_89] : memref<64x128xf32, #tpu.memory_space<vmem>>, vector<64x128xf32>
    tpu.vector_store %arg8[%c0_88, %c0_89], %315 {strides = array<i32>} : memref<64x128xf32, #tpu.memory_space<vmem>>, vector<64x128xf32>,
    return
  }
}

</mosaic_0001>

<llo_original>
// kernel: char_rnn_forward.1
$region0: #{char_rnn_forward.1}
  #allocation0 [shape = 'u32[]', space=smem, size = 0x4, offset = 0x4, fixed_abs, tag = 'smem constant byte address 0x4 - core index']
  #allocation1 [shape = 'u32[144,128]{1,0:T(1,128)}', space=vmem, size = 0x12000, scoped, tag = 'internal scratch']
  #allocation2 [shape = 'f32[8,8,384]{2,1,0:T(8,128)}', space=vmem, size = 0x18000, scoped, tag = 'scratch operand']
  #allocation3 [shape = 'f32[8,8,128]{2,1,0:T(8,128)}', space=vmem, size = 0x8000, scoped, tag = 'scratch operand']
  %s0 = inlined_call_operand.vmem [shape: bf16[64,128], index: 0, kind: input, shape index: {}]
  %s1 = inlined_call_operand.vmem [shape: bf16[128,384], index: 1, kind: input, shape index: {}]
  %s2 = inlined_call_operand.hbm [shape: f32[1,384], index: 2, kind: input, shape index: {}]
  %s3 = inlined_call_operand.hbm [shape: bf16[128,384], index: 3, kind: input, shape index: {}]
  %s4 = inlined_call_operand.hbm [shape: f32[1,384], index: 4, kind: input, shape index: {}]
  %s5 = inlined_call_operand.hbm [shape: bf16[128,128], index: 5, kind: input, shape index: {}]
  %s6 = inlined_call_operand.vmem [shape: f32[1,128], index: 6, kind: input, shape index: {}]
  %s7 = inlined_call_operand.vmem [shape: f32[8,128], index: 7, kind: input, shape index: {}]
  %s8 = inlined_call_operand.vmem [shape: f32[64,128], index: 8, kind: output, shape index: {0}]
  %s9 = inlined_call_operand.vmem [shape: f32[8,128], index: 9, kind: output, shape index: {1}]
  %10 = xla_tuple %s8, %s9
  %s11 = sld [smem:[#allocation0]]
  $region66: #{char_rnn_forward.1} parent=0
    _
  %s13 = ssub.s32 1, %s11
  %s14 = scalar_select 0, %s13, %s11
  $region1: #{char_rnn_forward.1} parent=0
    #allocation4 [shape = 'u8[1536]{0}', space=vmem, size = 0x800, scoped, tag = 'input window, operand 2, single buffered']
    #allocation5 [shape = 's32[1]{0}', space=sflag, size = 0x4, scoped, tag = 'scoped memory for char_rnn_forward.1']
    #allocation6 [shape = 'u8[98304]{0}', space=vmem, size = 0x18000, scoped, tag = 'input window, operand 3, single buffered']
    #allocation7 [shape = 's32[1]{0}', space=sflag, size = 0x4, scoped, tag = 'scoped memory for char_rnn_forward.1']
    #allocation8 [shape = 'u8[1536]{0}', space=vmem, size = 0x800, scoped, tag = 'input window, operand 4, single buffered']
    #allocation9 [shape = 'u8[32768]{0}', space=vmem, size = 0x8000, scoped, tag = 'input window, operand 5, single buffered']
    #allocation10 [shape = 's32[1]{0}', space=sflag, size = 0x4, scoped, tag = 'scoped memory for char_rnn_forward.1']
    %15 = vsyncpa [#allocation5], 0
    %16 = vsyncpa [#allocation7], 0
    %17 = vsyncpa [#allocation10], 0
    // Predicated region
    $region2: #{char_rnn_forward.1} parent=1 // pred_check
      _
    $region3: #{char_rnn_forward.1} parent=1 // pred_check_branch
      %19 = sbr.rel (0) target = $region5
    $region4: #{char_rnn_forward.1} parent=1 // pred_region
      _
    $region5: #{char_rnn_forward.1} parent=1 // pred_fallthru
      _
    // Predicated region
    $region6: #{char_rnn_forward.1} parent=1 // pred_check
      _
    $region7: #{char_rnn_forward.1} parent=1 // pred_check_branch
      %21 = sbr.rel (0) target = $region9
    $region8: #{char_rnn_forward.1} parent=1 // pred_region
      _
    $region9: #{char_rnn_forward.1} parent=1 // pred_fallthru
      _
    // Predicated region
    $region10: #{char_rnn_forward.1} parent=1 // pred_check
      _
    $region11: #{char_rnn_forward.1} parent=1 // pred_check_branch
      %23 = sbr.rel (0) target = $region13
    $region12: #{char_rnn_forward.1} parent=1 // pred_region
      %s25 = ssub.s32 48, 48
      %26 = vsyncadd [#allocation5], %s25
      %s28 = sshll.u32 [#allocation4], 4
      %s29 = int_to_ptr.vmem [resolvable:$true] %s28
      %31 = dma.hbm_to_vmem [thread:$0]  %s2, 48, %s29, [#allocation5]
    $region13: #{char_rnn_forward.1} parent=1 // pred_fallthru
      _
    // Predicated region
    $region14: #{char_rnn_forward.1} parent=1 // pred_check
      _
    $region15: #{char_rnn_forward.1} parent=1 // pred_check_branch
      %33 = sbr.rel (0) target = $region17
    $region16: #{char_rnn_forward.1} parent=1 // pred_region
      %s35 = ssub.s32 3072, 3072
      %36 = vsyncadd [#allocation7], %s35
      %s37 = sshll.u32 [#allocation6], 4
      %s38 = int_to_ptr.vmem [resolvable:$true] %s37
      %43 = dma.hbm_to_vmem [thread:$0]  %s3, 3072, %s38, [#allocation7], 192, 192, 12
    $region17: #{char_rnn_forward.1} parent=1 // pred_fallthru
      _
    // Predicated region
    $region18: #{char_rnn_forward.1} parent=1 // pred_check
      _
    $region19: #{char_rnn_forward.1} parent=1 // pred_check_branch
      %45 = sbr.rel (0) target = $region21
    $region20: #{char_rnn_forward.1} parent=1 // pred_region
      %s47 = ssub.s32 48, 48
      %48 = vsyncadd [#allocation7], %s47
      %s50 = sshll.u32 [#allocation8], 4
      %s51 = int_to_ptr.vmem [resolvable:$true] %s50
      %53 = dma.hbm_to_vmem [thread:$0]  %s4, 48, %s51, [#allocation7]
    $region21: #{char_rnn_forward.1} parent=1 // pred_fallthru
      _
    // Predicated region
    $region22: #{char_rnn_forward.1} parent=1 // pred_check
      _
    $region23: #{char_rnn_forward.1} parent=1 // pred_check_branch
      %55 = sbr.rel (0) target = $region25
    $region24: #{char_rnn_forward.1} parent=1 // pred_region
      %s57 = ssub.s32 1024, 1024
      %58 = vsyncadd [#allocation10], %s57
      %s59 = sshll.u32 [#allocation9], 4
      %s60 = int_to_ptr.vmem [resolvable:$true] %s59
      %65 = dma.hbm_to_vmem [thread:$0]  %s5, 1024, %s60, [#allocation10], 64, 64, 4
    $region25: #{char_rnn_forward.1} parent=1 // pred_fallthru
      _
    // Predicated region
    $region26: #{char_rnn_forward.1} parent=1 // pred_check
      _
    $region27: #{char_rnn_forward.1} parent=1 // pred_check_branch
      %67 = sbr.rel (0) target = $region29
    $region28: #{char_rnn_forward.1} parent=1 // pred_region
      _
    $region29: #{char_rnn_forward.1} parent=1 // pred_fallthru
      _
    // Predicated region
    $region30: #{char_rnn_forward.1} parent=1 // pred_check
      _
    $region31: #{char_rnn_forward.1} parent=1 // pred_check_branch
      %69 = sbr.rel (0) target = $region33
    $region32: #{char_rnn_forward.1} parent=1 // pred_region
      _
    $region33: #{char_rnn_forward.1} parent=1 // pred_fallthru
      _
    // Predicated region
    $region34: #{char_rnn_forward.1} parent=1 // pred_check
      _
    $region35: #{char_rnn_forward.1} parent=1 // pred_check_branch
      %71 = sbr.rel (0) target = $region37
    $region36: #{char_rnn_forward.1} parent=1 // pred_region
      %72 = dma.done [#allocation5], 48
    $region37: #{char_rnn_forward.1} parent=1 // pred_fallthru
      _
    // Predicated region
    $region38: #{char_rnn_forward.1} parent=1 // pred_check
      _
    $region39: #{char_rnn_forward.1} parent=1 // pred_check_branch
      %74 = sbr.rel (0) target = $region41
    $region40: #{char_rnn_forward.1} parent=1 // pred_region
      %75 = dma.done [#allocation7], 3072
    $region41: #{char_rnn_forward.1} parent=1 // pred_fallthru
      _
    // Predicated region
    $region42: #{char_rnn_forward.1} parent=1 // pred_check
      _
    $region43: #{char_rnn_forward.1} parent=1 // pred_check_branch
      %77 = sbr.rel (0) target = $region45
    $region44: #{char_rnn_forward.1} parent=1 // pred_region
      %78 = dma.done [#allocation7], 48
    $region45: #{char_rnn_forward.1} parent=1 // pred_fallthru
      _
    // Predicated region
    $region46: #{char_rnn_forward.1} parent=1 // pred_check
      _
    $region47: #{char_rnn_forward.1} parent=1 // pred_check_branch
      %80 = sbr.rel (0) target = $region49
    $region48: #{char_rnn_forward.1} parent=1 // pred_region
      %81 = dma.done [#allocation10], 1024
    $region49: #{char_rnn_forward.1} parent=1 // pred_fallthru
      _
    %v83 = vld [vmem:[%s0] sm:$0xf]
    %v84 = vld [vmem:[%s0 + $0x4] sm:$0xf]
    %v85 = vld [vmem:[%s0 + $0x8] sm:$0xf]
    %v86 = vld [vmem:[%s0 + $0xc] sm:$0xf]
    %v87 = vld [vmem:[%s0 + $0x10] sm:$0xf]
    %v88 = vld [vmem:[%s0 + $0x14] sm:$0xf]
    %v89 = vld [vmem:[%s0 + $0x18] sm:$0xf]
    %v90 = vld [vmem:[%s0 + $0x1c] sm:$0xf]
    %v91 = vld [vmem:[%s1] sm:$0xff]
    %v92 = vld [vmem:[%s1 + $0x8] sm:$0xf]
    %v93 = vld [vmem:[%s1 + $0xc] sm:$0xff]
    %v94 = vld [vmem:[%s1 + $0x14] sm:$0xf]
    %v95 = vld [vmem:[%s1 + $0x18] sm:$0xff]
    %v96 = vld [vmem:[%s1 + $0x20] sm:$0xf]
    %v97 = vld [vmem:[%s1 + $0x24] sm:$0xff]
    %v98 = vld [vmem:[%s1 + $0x2c] sm:$0xf]
    %v99 = vld [vmem:[%s1 + $0x30] sm:$0xff]
    %v100 = vld [vmem:[%s1 + $0x38] sm:$0xf]
    %v101 = vld [vmem:[%s1 + $0x3c] sm:$0xff]
    %v102 = vld [vmem:[%s1 + $0x44] sm:$0xf]
    %v103 = vld [vmem:[%s1 + $0x48] sm:$0xff]
    %v104 = vld [vmem:[%s1 + $0x50] sm:$0xf]
    %v105 = vld [vmem:[%s1 + $0x54] sm:$0xff]
    %v106 = vld [vmem:[%s1 + $0x5c] sm:$0xf]
    %v107 = vld [vmem:[%s1 + $0x60] sm:$0xff]
    %v108 = vld [vmem:[%s1 + $0x68] sm:$0xf]
    %v109 = vld [vmem:[%s1 + $0x6c] sm:$0xff]
    %v110 = vld [vmem:[%s1 + $0x74] sm:$0xf]
    %v111 = vld [vmem:[%s1 + $0x78] sm:$0xff]
    %v112 = vld [vmem:[%s1 + $0x80] sm:$0xf]
    %v113 = vld [vmem:[%s1 + $0x84] sm:$0xff]
    %v114 = vld [vmem:[%s1 + $0x8c] sm:$0xf]
    %v115 = vld [vmem:[%s1 + $0x90] sm:$0xff]
    %v116 = vld [vmem:[%s1 + $0x98] sm:$0xf]
    %v117 = vld [vmem:[%s1 + $0x9c] sm:$0xff]
    %v118 = vld [vmem:[%s1 + $0xa4] sm:$0xf]
    %v119 = vld [vmem:[%s1 + $0xa8] sm:$0xff]
    %v120 = vld [vmem:[%s1 + $0xb0] sm:$0xf]
    %v121 = vld [vmem:[%s1 + $0xb4] sm:$0xff]
    %v122 = vld [vmem:[%s1 + $0xbc] sm:$0xf]
    %v123 = vld [vmem:[#allocation4] sm:$0x7]
    %v125 = vlaneseq
    %v126 = vshrl.u32 %v125, 7
    %v127 = vsub.s32 0, %v126
    %v128 = vrot.slane %v123, %v127
    %v129 = vlaneseq
    %v130 = vshrl.u32 %v129, 7
    %v131 = vsub.s32 1, %v130
    %v132 = vrot.slane %v123, %v131
    %v133 = vlaneseq
    %v134 = vshrl.u32 %v133, 7
    %v135 = vsub.s32 2, %v134
    %v136 = vrot.slane %v123, %v135
    %v148 = vunpack.c.l.b16 %v83
    %v149 = vunpack.c.l.b16 %v84
    %v150 = vunpack.c.l.b16 %v85
    %v151 = vunpack.c.l.b16 %v86
    %v152 = vunpack.c.l.b16 %v87
    %v153 = vunpack.c.l.b16 %v88
    %v154 = vunpack.c.l.b16 %v89
    %v155 = vunpack.c.l.b16 %v90
    %v156 = vpack.c.b16 %v149, %v148
    %v157 = vpack.c.b16 %v151, %v150
    %v158 = vpack.c.b16 %v153, %v152
    %v159 = vpack.c.b16 %v155, %v154
    %v196 = vunpack.c.l.b16 %v91
    %v197 = vunpack.c.h.b16 %v91
    %v198 = vunpack.c.l.b16 %v92
    %v199 = vunpack.c.l.b16 %v93
    %v200 = vunpack.c.h.b16 %v93
    %v201 = vunpack.c.l.b16 %v94
    %v202 = vunpack.c.l.b16 %v95
    %v203 = vunpack.c.h.b16 %v95
    %v204 = vunpack.c.l.b16 %v96
    %v205 = vunpack.c.l.b16 %v97
    %v206 = vunpack.c.h.b16 %v97
    %v207 = vunpack.c.l.b16 %v98
    %v208 = vunpack.c.l.b16 %v99
    %v209 = vunpack.c.h.b16 %v99
    %v210 = vunpack.c.l.b16 %v100
    %v211 = vunpack.c.l.b16 %v101
    %v212 = vunpack.c.h.b16 %v101
    %v213 = vunpack.c.l.b16 %v102
    %v214 = vunpack.c.l.b16 %v103
    %v215 = vunpack.c.h.b16 %v103
    %v216 = vunpack.c.l.b16 %v104
    %v217 = vunpack.c.l.b16 %v105
    %v218 = vunpack.c.h.b16 %v105
    %v219 = vunpack.c.l.b16 %v106
    %v220 = vunpack.c.l.b16 %v107
    %v221 = vunpack.c.h.b16 %v107
    %v222 = vunpack.c.l.b16 %v108
    %v223 = vunpack.c.l.b16 %v109
    %v224 = vunpack.c.h.b16 %v109
    %v225 = vunpack.c.l.b16 %v110
    %v226 = vunpack.c.l.b16 %v111
    %v227 = vunpack.c.h.b16 %v111
    %v228 = vunpack.c.l.b16 %v112
    %v229 = vunpack.c.l.b16 %v113
    %v230 = vunpack.c.h.b16 %v113
    %v231 = vunpack.c.l.b16 %v114
    %v232 = vunpack.c.l.b16 %v115
    %v233 = vunpack.c.h.b16 %v115
    %v234 = vunpack.c.l.b16 %v116
    %v235 = vunpack.c.l.b16 %v117
    %v236 = vunpack.c.h.b16 %v117
    %v237 = vunpack.c.l.b16 %v118
    %v238 = vunpack.c.l.b16 %v119
    %v239 = vunpack.c.h.b16 %v119
    %v240 = vunpack.c.l.b16 %v120
    %v241 = vunpack.c.l.b16 %v121
    %v242 = vunpack.c.h.b16 %v121
    %v243 = vunpack.c.l.b16 %v122
    %v244 = vpack.c.b16 %v199, %v196
    %v245 = vpack.c.b16 %v200, %v197
    %v246 = vpack.c.b16 %v201, %v198
    %v247 = vpack.c.b16 %v205, %v202
    %v248 = vpack.c.b16 %v206, %v203
    %v249 = vpack.c.b16 %v207, %v204
    %v250 = vpack.c.b16 %v211, %v208
    %v251 = vpack.c.b16 %v212, %v209
    %v252 = vpack.c.b16 %v213, %v210
    %v253 = vpack.c.b16 %v217, %v214
    %v254 = vpack.c.b16 %v218, %v215
    %v255 = vpack.c.b16 %v219, %v216
    %v256 = vpack.c.b16 %v223, %v220
    %v257 = vpack.c.b16 %v224, %v221
    %v258 = vpack.c.b16 %v225, %v222
    %v259 = vpack.c.b16 %v229, %v226
    %v260 = vpack.c.b16 %v230, %v227
    %v261 = vpack.c.b16 %v231, %v228
    %v262 = vpack.c.b16 %v235, %v232
    %v263 = vpack.c.b16 %v236, %v233
    %v264 = vpack.c.b16 %v237, %v234
    %v265 = vpack.c.b16 %v241, %v238
    %v266 = vpack.c.b16 %v242, %v239
    %v267 = vpack.c.b16 %v243, %v240
    %292 = vmatprep.subr.bf16.mxu0 %v245
    %293 = vmatpush1.bf16.msra.mxu0 %v244
    %294 = vmatprep.subr.bf16.mxu0 %v248
    %295 = vmatpush1.bf16.msra.mxu0 %v247
    %296 = vmatprep.subr.bf16.mxu0 %v251
    %297 = vmatpush1.bf16.msra.mxu0 %v250
    %298 = vmatprep.subr.bf16.mxu0 %v254
    %299 = vmatpush1.bf16.msra.mxu0 %v253
    %300 = vmatprep.subr.bf16.mxu0 %v257
    %301 = vmatpush1.bf16.msra.mxu0 %v256
    %302 = vmatprep.subr.bf16.mxu0 %v260
    %303 = vmatpush1.bf16.msra.mxu0 %v259
    %304 = vmatprep.subr.bf16.mxu0 %v263
    %305 = vmatpush1.bf16.msra.mxu0 %v262
    %306 = vmatprep.subr.bf16.mxu0 %v266
    %307 = vmatpush1.bf16.msra.mxu0 %v265
    %308 = vmatprep.subr.bf16.mxu0 0
    %309 = vmatpush1.bf16.msra.mxu0 0
    %310 = vmatprep.subr.bf16.mxu0 0
    %311 = vmatpush1.bf16.msra.mxu0 0
    %312 = vmatprep.subr.bf16.mxu0 0
    %313 = vmatpush1.bf16.msra.mxu0 0
    %314 = vmatprep.subr.bf16.mxu0 0
    %315 = vmatpush1.bf16.msra.mxu0 0
    %316 = vmatprep.subr.bf16.mxu0 0
    %317 = vmatpush1.bf16.msra.mxu0 0
    %318 = vmatprep.subr.bf16.mxu0 0
    %319 = vmatpush1.bf16.msra.mxu0 0
    %320 = vmatprep.subr.bf16.mxu0 0
    %321 = vmatpush1.bf16.msra.mxu0 0
    %322 = vmatprep.subr.bf16.mxu0 0
    %323 = vmatpush1.bf16.msra.mxu0 0
    %324 = vmatprep.mubr.bf16.mxu0 0
    %325 = vmatmul.mubr.bf16.gmra.mrb[0].mxu0 %v156
    %v326 = vpop.f32.mrb[0].mxu0
    %v327 = vadd.f32 %v128, %v326
    %v328 = vpop.f32.mrb[0].mxu0
    %v329 = vadd.f32 %v132, %v328
    %v330 = vpop.f32.mrb[0].mxu0
    %v331 = vadd.f32 %v128, %v330
    %v332 = vpop.f32.mrb[0].mxu0
    %v333 = vadd.f32 %v132, %v332
    %334 = vmatprep.mubr.bf16.mxu0 0
    %335 = vmatmul.mubr.bf16.gmra.mrb[0].mxu0 %v157
    %v336 = vpop.f32.mrb[0].mxu0
    %v337 = vadd.f32 %v128, %v336
    %v338 = vpop.f32.mrb[0].mxu0
    %v339 = vadd.f32 %v132, %v338
    %v340 = vpop.f32.mrb[0].mxu0
    %v341 = vadd.f32 %v128, %v340
    %v342 = vpop.f32.mrb[0].mxu0
    %v343 = vadd.f32 %v132, %v342
    %344 = vmatprep.mubr.bf16.mxu0 0
    %345 = vmatmul.mubr.bf16.gmra.mrb[0].mxu0 %v158
    %v346 = vpop.f32.mrb[0].mxu0
    %v347 = vadd.f32 %v128, %v346
    %v348 = vpop.f32.mrb[0].mxu0
    %v349 = vadd.f32 %v132, %v348
    %v350 = vpop.f32.mrb[0].mxu0
    %v351 = vadd.f32 %v128, %v350
    %v352 = vpop.f32.mrb[0].mxu0
    %v353 = vadd.f32 %v132, %v352
    %354 = vmatprep.mubr.bf16.mxu0 0
    %355 = vmatmul.mubr.bf16.gmra.mrb[0].mxu0 %v159
    %v356 = vpop.f32.mrb[0].mxu0
    %v357 = vadd.f32 %v128, %v356
    %v358 = vpop.f32.mrb[0].mxu0
    %v359 = vadd.f32 %v132, %v358
    %v360 = vpop.f32.mrb[0].mxu0
    %v361 = vadd.f32 %v128, %v360
    %v362 = vpop.f32.mrb[0].mxu0
    %v363 = vadd.f32 %v132, %v362
    %364 = vdwg.mxu0
    %365 = vmatprep.subr.bf16.mxu0 0
    %366 = vmatpush1.bf16.msra.mxu0 %v246
    %367 = vmatprep.subr.bf16.mxu0 0
    %368 = vmatpush1.bf16.msra.mxu0 %v249
    %369 = vmatprep.subr.bf16.mxu0 0
    %370 = vmatpush1.bf16.msra.mxu0 %v252
    %371 = vmatprep.subr.bf16.mxu0 0
    %372 = vmatpush1.bf16.msra.mxu0 %v255
    %373 = vmatprep.subr.bf16.mxu0 0
    %374 = vmatpush1.bf16.msra.mxu0 %v258
    %375 = vmatprep.subr.bf16.mxu0 0
    %376 = vmatpush1.bf16.msra.mxu0 %v261
    %377 = vmatprep.subr.bf16.mxu0 0
    %378 = vmatpush1.bf16.msra.mxu0 %v264
    %379 = vmatprep.subr.bf16.mxu0 0
    %380 = vmatpush1.bf16.msra.mxu0 %v267
    %381 = vmatprep.subr.bf16.mxu0 0
    %382 = vmatpush1.bf16.msra.mxu0 0
    %383 = vmatprep.subr.bf16.mxu0 0
    %384 = vmatpush1.bf16.msra.mxu0 0
    %385 = vmatprep.subr.bf16.mxu0 0
    %386 = vmatpush1.bf16.msra.mxu0 0
    %387 = vmatprep.subr.bf16.mxu0 0
    %388 = vmatpush1.bf16.msra.mxu0 0
    %389 = vmatprep.subr.bf16.mxu0 0
    %390 = vmatpush1.bf16.msra.mxu0 0
    %391 = vmatprep.subr.bf16.mxu0 0
    %392 = vmatpush1.bf16.msra.mxu0 0
    %393 = vmatprep.subr.bf16.mxu0 0
    %394 = vmatpush1.bf16.msra.mxu0 0
    %395 = vmatprep.subr.bf16.mxu0 0
    %396 = vmatpush1.bf16.msra.mxu0 0
    %397 = vmatprep.mubr.bf16.mxu0 0
    %398 = vmatmul.mubr.bf16.gmra.mrb[0].mxu0 %v156
    %v399 = vpop.f32.mrb[0].mxu0
    %v400 = vadd.f32 %v136, %v399
    %v401 = vpop.f32.mrb[0].mxu0
    %v402 = vpop.f32.mrb[0].mxu0
    %v403 = vadd.f32 %v136, %v402
    %v404 = vpop.f32.mrb[0].mxu0
    %405 = vmatprep.mubr.bf16.mxu0 0
    %406 = vmatmul.mubr.bf16.gmra.mrb[0].mxu0 %v157
    %v407 = vpop.f32.mrb[0].mxu0
    %v408 = vadd.f32 %v136, %v407
    %v409 = vpop.f32.mrb[0].mxu0
    %v410 = vpop.f32.mrb[0].mxu0
    %v411 = vadd.f32 %v136, %v410
    %v412 = vpop.f32.mrb[0].mxu0
    %413 = vmatprep.mubr.bf16.mxu0 0
    %414 = vmatmul.mubr.bf16.gmra.mrb[0].mxu0 %v158
    %v415 = vpop.f32.mrb[0].mxu0
    %v416 = vadd.f32 %v136, %v415
    %v417 = vpop.f32.mrb[0].mxu0
    %v418 = vpop.f32.mrb[0].mxu0
    %v419 = vadd.f32 %v136, %v418
    %v420 = vpop.f32.mrb[0].mxu0
    %421 = vmatprep.mubr.bf16.mxu0 0
    %422 = vmatmul.mubr.bf16.gmra.mrb[0].mxu0 %v159
    %v423 = vpop.f32.mrb[0].mxu0
    %v424 = vadd.f32 %v136, %v423
    %v425 = vpop.f32.mrb[0].mxu0
    %v426 = vpop.f32.mrb[0].mxu0
    %v427 = vadd.f32 %v136, %v426
    %v428 = vpop.f32.mrb[0].mxu0
    %429 = vdwg.mxu0
    %430 = vst [vmem:[#allocation2] sm:$0xff] %v327
    %431 = vst [vmem:[#allocation2 + $0x8] sm:$0xff] %v329
    %432 = vst [vmem:[#allocation2 + $0x10] sm:$0xff] %v400
    %433 = vst [vmem:[#allocation2 + $0x18] sm:$0xff] %v331
    %434 = vst [vmem:[#allocation2 + $0x20] sm:$0xff] %v333
    %435 = vst [vmem:[#allocation2 + $0x28] sm:$0xff] %v403
    %436 = vst [vmem:[#allocation2 + $0x30] sm:$0xff] %v337
    %437 = vst [vmem:[#allocation2 + $0x38] sm:$0xff] %v339
    %438 = vst [vmem:[#allocation2 + $0x40] sm:$0xff] %v408
    %439 = vst [vmem:[#allocation2 + $0x48] sm:$0xff] %v341
    %440 = vst [vmem:[#allocation2 + $0x50] sm:$0xff] %v343
    %441 = vst [vmem:[#allocation2 + $0x58] sm:$0xff] %v411
    %442 = vst [vmem:[#allocation2 + $0x60] sm:$0xff] %v347
    %443 = vst [vmem:[#allocation2 + $0x68] sm:$0xff] %v349
    %444 = vst [vmem:[#allocation2 + $0x70] sm:$0xff] %v416
    %445 = vst [vmem:[#allocation2 + $0x78] sm:$0xff] %v351
    %446 = vst [vmem:[#allocation2 + $0x80] sm:$0xff] %v353
    %447 = vst [vmem:[#allocation2 + $0x88] sm:$0xff] %v419
    %448 = vst [vmem:[#allocation2 + $0x90] sm:$0xff] %v357
    %449 = vst [vmem:[#allocation2 + $0x98] sm:$0xff] %v359
    %450 = vst [vmem:[#allocation2 + $0xa0] sm:$0xff] %v424
    %451 = vst [vmem:[#allocation2 + $0xa8] sm:$0xff] %v361
    %452 = vst [vmem:[#allocation2 + $0xb0] sm:$0xff] %v363
    %453 = vst [vmem:[#allocation2 + $0xb8] sm:$0xff] %v427
    %v454 = vld [vmem:[#allocation6] sm:$0xff]
    %v455 = vld [vmem:[#allocation6 + $0x8] sm:$0xf]
    %v456 = vld [vmem:[#allocation6 + $0xc] sm:$0xff]
    %v457 = vld [vmem:[#allocation6 + $0x14] sm:$0xf]
    %v458 = vld [vmem:[#allocation6 + $0x18] sm:$0xff]
    %v459 = vld [vmem:[#allocation6 + $0x20] sm:$0xf]
    %v460 = vld [vmem:[#allocation6 + $0x24] sm:$0xff]
    %v461 = vld [vmem:[#allocation6 + $0x2c] sm:$0xf]
    %v462 = vld [vmem:[#allocation6 + $0x30] sm:$0xff]
    %v463 = vld [vmem:[#allocation6 + $0x38] sm:$0xf]
    %v464 = vld [vmem:[#allocation6 + $0x3c] sm:$0xff]
    %v465 = vld [vmem:[#allocation6 + $0x44] sm:$0xf]
    %v466 = vld [vmem:[#allocation6 + $0x48] sm:$0xff]
    %v467 = vld [vmem:[#allocation6 + $0x50] sm:$0xf]
    %v468 = vld [vmem:[#allocation6 + $0x54] sm:$0xff]
    %v469 = vld [vmem:[#allocation6 + $0x5c] sm:$0xf]
    %v470 = vld [vmem:[#allocation6 + $0x60] sm:$0xff]
    %v471 = vld [vmem:[#allocation6 + $0x68] sm:$0xf]
    %v472 = vld [vmem:[#allocation6 + $0x6c] sm:$0xff]
    %v473 = vld [vmem:[#allocation6 + $0x74] sm:$0xf]
    %v474 = vld [vmem:[#allocation6 + $0x78] sm:$0xff]
    %v475 = vld [vmem:[#allocation6 + $0x80] sm:$0xf]
    %v476 = vld [vmem:[#allocation6 + $0x84] sm:$0xff]
    %v477 = vld [vmem:[#allocation6 + $0x8c] sm:$0xf]
    %v478 = vld [vmem:[#allocation6 + $0x90] sm:$0xff]
    %v479 = vld [vmem:[#allocation6 + $0x98] sm:$0xf]
    %v480 = vld [vmem:[#allocation6 + $0x9c] sm:$0xff]
    %v481 = vld [vmem:[#allocation6 + $0xa4] sm:$0xf]
    %v482 = vld [vmem:[#allocation6 + $0xa8] sm:$0xff]
    %v483 = vld [vmem:[#allocation6 + $0xb0] sm:$0xf]
    %v484 = vld [vmem:[#allocation6 + $0xb4] sm:$0xff]
    %v485 = vld [vmem:[#allocation6 + $0xbc] sm:$0xf]
    %v486 = vld [vmem:[#allocation8] sm:$0x7]
    %v487 = vld [vmem:[%s7] sm:$0xff]
    %v488 = vpack.c.bf16 %v487, %v487
    %v490 = vlaneseq
    %v491 = vshrl.u32 %v490, 7
    %v492 = vsub.s32 0, %v491
    %v493 = vrot.slane %v486, %v492
    %v494 = vlaneseq
    %v495 = vshrl.u32 %v494, 7
    %v496 = vsub.s32 1, %v495
    %v497 = vrot.slane %v486, %v496
    %v498 = vlaneseq
    %v499 = vshrl.u32 %v498, 7
    %v500 = vsub.s32 2, %v499
    %v501 = vrot.slane %v486, %v500
    %v537 = vunpack.c.l.b16 %v454
    %v538 = vunpack.c.h.b16 %v454
    %v539 = vunpack.c.l.b16 %v455
    %v540 = vunpack.c.l.b16 %v456
    %v541 = vunpack.c.h.b16 %v456
    %v542 = vunpack.c.l.b16 %v457
    %v543 = vunpack.c.l.b16 %v458
    %v544 = vunpack.c.h.b16 %v458
    %v545 = vunpack.c.l.b16 %v459
    %v546 = vunpack.c.l.b16 %v460
    %v547 = vunpack.c.h.b16 %v460
    %v548 = vunpack.c.l.b16 %v461
    %v549 = vunpack.c.l.b16 %v462
    %v550 = vunpack.c.h.b16 %v462
    %v551 = vunpack.c.l.b16 %v463
    %v552 = vunpack.c.l.b16 %v464
    %v553 = vunpack.c.h.b16 %v464
    %v554 = vunpack.c.l.b16 %v465
    %v555 = vunpack.c.l.b16 %v466
    %v556 = vunpack.c.h.b16 %v466
    %v557 = vunpack.c.l.b16 %v467
    %v558 = vunpack.c.l.b16 %v468
    %v559 = vunpack.c.h.b16 %v468
    %v560 = vunpack.c.l.b16 %v469
    %v561 = vunpack.c.l.b16 %v470
    %v562 = vunpack.c.h.b16 %v470
    %v563 = vunpack.c.l.b16 %v471
    %v564 = vunpack.c.l.b16 %v472
    %v565 = vunpack.c.h.b16 %v472
    %v566 = vunpack.c.l.b16 %v473
    %v567 = vunpack.c.l.b16 %v474
    %v568 = vunpack.c.h.b16 %v474
    %v569 = vunpack.c.l.b16 %v475
    %v570 = vunpack.c.l.b16 %v476
    %v571 = vunpack.c.h.b16 %v476
    %v572 = vunpack.c.l.b16 %v477
    %v573 = vunpack.c.l.b16 %v478
    %v574 = vunpack.c.h.b16 %v478
    %v575 = vunpack.c.l.b16 %v479
    %v576 = vunpack.c.l.b16 %v480
    %v577 = vunpack.c.h.b16 %v480
    %v578 = vunpack.c.l.b16 %v481
    %v579 = vunpack.c.l.b16 %v482
    %v580 = vunpack.c.h.b16 %v482
    %v581 = vunpack.c.l.b16 %v483
    %v582 = vunpack.c.l.b16 %v484
    %v583 = vunpack.c.h.b16 %v484
    %v584 = vunpack.c.l.b16 %v485
    %v585 = vpack.c.b16 %v540, %v537
    %v586 = vpack.c.b16 %v541, %v538
    %v587 = vpack.c.b16 %v542, %v539
    %v588 = vpack.c.b16 %v546, %v543
    %v589 = vpack.c.b16 %v547, %v544
    %v590 = vpack.c.b16 %v548, %v545
    %v591 = vpack.c.b16 %v552, %v549
    %v592 = vpack.c.b16 %v553, %v550
    %v593 = vpack.c.b16 %v554, %v551
    %v594 = vpack.c.b16 %v558, %v555
    %v595 = vpack.c.b16 %v559, %v556
    %v596 = vpack.c.b16 %v560, %v557
    %v597 = vpack.c.b16 %v564, %v561
    %v598 = vpack.c.b16 %v565, %v562
    %v599 = vpack.c.b16 %v566, %v563
    %v600 = vpack.c.b16 %v570, %v567
    %v601 = vpack.c.b16 %v571, %v568
    %v602 = vpack.c.b16 %v572, %v569
    %v603 = vpack.c.b16 %v576, %v573
    %v604 = vpack.c.b16 %v577, %v574
    %v605 = vpack.c.b16 %v578, %v575
    %v606 = vpack.c.b16 %v582, %v579
    %v607 = vpack.c.b16 %v583, %v580
    %v608 = vpack.c.b16 %v584, %v581
    %633 = vmatprep.subr.bf16.mxu0 %v586
    %634 = vmatpush1.bf16.msra.mxu0 %v585
    %635 = vmatprep.subr.bf16.mxu0 %v589
    %636 = vmatpush1.bf16.msra.mxu0 %v588
    %637 = vmatprep.subr.bf16.mxu0 %v592
    %638 = vmatpush1.bf16.msra.mxu0 %v591
    %639 = vmatprep.subr.bf16.mxu0 %v595
    %640 = vmatpush1.bf16.msra.mxu0 %v594
    %641 = vmatprep.subr.bf16.mxu0 %v598
    %642 = vmatpush1.bf16.msra.mxu0 %v597
    %643 = vmatprep.subr.bf16.mxu0 %v601
    %644 = vmatpush1.bf16.msra.mxu0 %v600
    %645 = vmatprep.subr.bf16.mxu0 %v604
    %646 = vmatpush1.bf16.msra.mxu0 %v603
    %647 = vmatprep.subr.bf16.mxu0 %v607
    %648 = vmatpush1.bf16.msra.mxu0 %v606
    %649 = vmatprep.subr.bf16.mxu0 0
    %650 = vmatpush1.bf16.msra.mxu0 0
    %651 = vmatprep.subr.bf16.mxu0 0
    %652 = vmatpush1.bf16.msra.mxu0 0
    %653 = vmatprep.subr.bf16.mxu0 0
    %654 = vmatpush1.bf16.msra.mxu0 0
    %655 = vmatprep.subr.bf16.mxu0 0
    %656 = vmatpush1.bf16.msra.mxu0 0
    %657 = vmatprep.subr.bf16.mxu0 0
    %658 = vmatpush1.bf16.msra.mxu0 0
    %659 = vmatprep.subr.bf16.mxu0 0
    %660 = vmatpush1.bf16.msra.mxu0 0
    %661 = vmatprep.subr.bf16.mxu0 0
    %662 = vmatpush1.bf16.msra.mxu0 0
    %663 = vmatprep.subr.bf16.mxu0 0
    %664 = vmatpush1.bf16.msra.mxu0 0
    %665 = vmatprep.mubr.bf16.mxu0 0
    %666 = vmatmul.mubr.bf16.gmra.mrb[0].mxu0 %v488
    %v667 = vpop.f32.mrb[0].mxu0
    %v668 = vadd.f32 %v493, %v667
    %v669 = vpop.f32.mrb[0].mxu0
    %v670 = vadd.f32 %v497, %v669
    %v671 = vpop.f32.mrb[0].mxu0
    %v672 = vpop.f32.mrb[0].mxu0
    %673 = vdwg.mxu0
    %674 = vmatprep.subr.bf16.mxu0 0
    %675 = vmatpush1.bf16.msra.mxu0 %v587
    %676 = vmatprep.subr.bf16.mxu0 0
    %677 = vmatpush1.bf16.msra.mxu0 %v590
    %678 = vmatprep.subr.bf16.mxu0 0
    %679 = vmatpush1.bf16.msra.mxu0 %v593
    %680 = vmatprep.subr.bf16.mxu0 0
    %681 = vmatpush1.bf16.msra.mxu0 %v596
    %682 = vmatprep.subr.bf16.mxu0 0
    %683 = vmatpush1.bf16.msra.mxu0 %v599
    %684 = vmatprep.subr.bf16.mxu0 0
    %685 = vmatpush1.bf16.msra.mxu0 %v602
    %686 = vmatprep.subr.bf16.mxu0 0
    %687 = vmatpush1.bf16.msra.mxu0 %v605
    %688 = vmatprep.subr.bf16.mxu0 0
    %689 = vmatpush1.bf16.msra.mxu0 %v608
    %690 = vmatprep.subr.bf16.mxu0 0
    %691 = vmatpush1.bf16.msra.mxu0 0
    %692 = vmatprep.subr.bf16.mxu0 0
    %693 = vmatpush1.bf16.msra.mxu0 0
    %694 = vmatprep.subr.bf16.mxu0 0
    %695 = vmatpush1.bf16.msra.mxu0 0
    %696 = vmatprep.subr.bf16.mxu0 0
    %697 = vmatpush1.bf16.msra.mxu0 0
    %698 = vmatprep.subr.bf16.mxu0 0
    %699 = vmatpush1.bf16.msra.mxu0 0
    %700 = vmatprep.subr.bf16.mxu0 0
    %701 = vmatpush1.bf16.msra.mxu0 0
    %702 = vmatprep.subr.bf16.mxu0 0
    %703 = vmatpush1.bf16.msra.mxu0 0
    %704 = vmatprep.subr.bf16.mxu0 0
    %705 = vmatpush1.bf16.msra.mxu0 0
    %706 = vmatprep.mubr.bf16.mxu0 0
    %707 = vmatmul.mubr.bf16.gmra.mrb[0].mxu0 %v488
    %v708 = vpop.f32.mrb[0].mxu0
    %v709 = vadd.f32 %v501, %v708
    %v710 = vpop.f32.mrb[0].mxu0
    %v711 = vpop.f32.mrb[0].mxu0
    %v712 = vpop.f32.mrb[0].mxu0
    %713 = vdwg.mxu0
    %v714 = vld [vmem:[#allocation2] sm:$0xff]
    %v715 = vld [vmem:[#allocation2 + $0x8] sm:$0xff]
    %v716 = vld [vmem:[#allocation2 + $0x10] sm:$0xff]
    %v717 = vadd.f32 %v714, %v668
    %v718 = vxor.u32 %v717, 2147483648
    %v719 = vmul.f32 %v718, 1.442695
    %v720 = vpow.pop %v719
    %v721 = vadd.f32 %v720, 1.0
    %v722 = vrcp.pop %v721
    %v723 = vmul.f32 1.0, %v722
    %v724 = vadd.f32 %v715, %v670
    %v725 = vxor.u32 %v724, 2147483648
    %v726 = vmul.f32 %v725, 1.442695
    %v727 = vpow.pop %v726
    %v728 = vadd.f32 %v727, 1.0
    %v729 = vrcp.pop %v728
    %v730 = vmul.f32 1.0, %v729
    %v731 = vmul.f32 %v723, %v709
    %v732 = vadd.f32 %v716, %v731
    %v733 = vtanh.pop %v732
    %v734 = vsub.f32 1.0, %v730
    %v735 = vmul.f32 %v734, %v733
    %v736 = vmul.f32 %v730, %v487
    %v737 = vadd.f32 %v735, %v736
    %738 = vst [vmem:[#allocation3] sm:$0xff] %v737
    %v739 = vpack.c.bf16 %v737, %v737
    %740 = vmatprep.subr.bf16.mxu0 %v586
    %741 = vmatpush1.bf16.msra.mxu0 %v585
    %742 = vmatprep.subr.bf16.mxu0 %v589
    %743 = vmatpush1.bf16.msra.mxu0 %v588
    %744 = vmatprep.subr.bf16.mxu0 %v592
    %745 = vmatpush1.bf16.msra.mxu0 %v591
    %746 = vmatprep.subr.bf16.mxu0 %v595
    %747 = vmatpush1.bf16.msra.mxu0 %v594
    %748 = vmatprep.subr.bf16.mxu0 %v598
    %749 = vmatpush1.bf16.msra.mxu0 %v597
    %750 = vmatprep.subr.bf16.mxu0 %v601
    %751 = vmatpush1.bf16.msra.mxu0 %v600
    %752 = vmatprep.subr.bf16.mxu0 %v604
    %753 = vmatpush1.bf16.msra.mxu0 %v603
    %754 = vmatprep.subr.bf16.mxu0 %v607
    %755 = vmatpush1.bf16.msra.mxu0 %v606
    %756 = vmatprep.subr.bf16.mxu0 0
    %757 = vmatpush1.bf16.msra.mxu0 0
    %758 = vmatprep.subr.bf16.mxu0 0
    %759 = vmatpush1.bf16.msra.mxu0 0
    %760 = vmatprep.subr.bf16.mxu0 0
    %761 = vmatpush1.bf16.msra.mxu0 0
    %762 = vmatprep.subr.bf16.mxu0 0
    %763 = vmatpush1.bf16.msra.mxu0 0
    %764 = vmatprep.subr.bf16.mxu0 0
    %765 = vmatpush1.bf16.msra.mxu0 0
    %766 = vmatprep.subr.bf16.mxu0 0
    %767 = vmatpush1.bf16.msra.mxu0 0
    %768 = vmatprep.subr.bf16.mxu0 0
    %769 = vmatpush1.bf16.msra.mxu0 0
    %770 = vmatprep.subr.bf16.mxu0 0
    %771 = vmatpush1.bf16.msra.mxu0 0
    %772 = vmatprep.mubr.bf16.mxu0 0
    %773 = vmatmul.mubr.bf16.gmra.mrb[0].mxu0 %v739
    %v774 = vpop.f32.mrb[0].mxu0
    %v775 = vadd.f32 %v493, %v774
    %v776 = vpop.f32.mrb[0].mxu0
    %v777 = vadd.f32 %v497, %v776
    %v778 = vpop.f32.mrb[0].mxu0
    %v779 = vpop.f32.mrb[0].mxu0
    %780 = vdwg.mxu0
    %781 = vmatprep.subr.bf16.mxu0 0
    %782 = vmatpush1.bf16.msra.mxu0 %v587
    %783 = vmatprep.subr.bf16.mxu0 0
    %784 = vmatpush1.bf16.msra.mxu0 %v590
    %785 = vmatprep.subr.bf16.mxu0 0
    %786 = vmatpush1.bf16.msra.mxu0 %v593
    %787 = vmatprep.subr.bf16.mxu0 0
    %788 = vmatpush1.bf16.msra.mxu0 %v596
    %789 = vmatprep.subr.bf16.mxu0 0
    %790 = vmatpush1.bf16.msra.mxu0 %v599
    %791 = vmatprep.subr.bf16.mxu0 0
    %792 = vmatpush1.bf16.msra.mxu0 %v602
    %793 = vmatprep.subr.bf16.mxu0 0
    %794 = vmatpush1.bf16.msra.mxu0 %v605
    %795 = vmatprep.subr.bf16.mxu0 0
    %796 = vmatpush1.bf16.msra.mxu0 %v608
    %797 = vmatprep.subr.bf16.mxu0 0
    %798 = vmatpush1.bf16.msra.mxu0 0
    %799 = vmatprep.subr.bf16.mxu0 0
    %800 = vmatpush1.bf16.msra.mxu0 0
    %801 = vmatprep.subr.bf16.mxu0 0
    %802 = vmatpush1.bf16.msra.mxu0 0
    %803 = vmatprep.subr.bf16.mxu0 0
    %804 = vmatpush1.bf16.msra.mxu0 0
    %805 = vmatprep.subr.bf16.mxu0 0
    %806 = vmatpush1.bf16.msra.mxu0 0
    %807 = vmatprep.subr.bf16.mxu0 0
    %808 = vmatpush1.bf16.msra.mxu0 0
    %809 = vmatprep.subr.bf16.mxu0 0
    %810 = vmatpush1.bf16.msra.mxu0 0
    %811 = vmatprep.subr.bf16.mxu0 0
    %812 = vmatpush1.bf16.msra.mxu0 0
    %813 = vmatprep.mubr.bf16.mxu0 0
    %814 = vmatmul.mubr.bf16.gmra.mrb[0].mxu0 %v739
    %v815 = vpop.f32.mrb[0].mxu0
    %v816 = vadd.f32 %v501, %v815
    %v817 = vpop.f32.mrb[0].mxu0
    %v818 = vpop.f32.mrb[0].mxu0
    %v819 = vpop.f32.mrb[0].mxu0
    %820 = vdwg.mxu0
    %s821 = scalar_lea.vmem [#allocation2], 24
    %v822 = vld [vmem:[%s821] sm:$0xff]
    %v823 = vld [vmem:[%s821 + $0x8] sm:$0xff]
    %v824 = vld [vmem:[%s821 + $0x10] sm:$0xff]
    %v825 = vadd.f32 %v822, %v775
    %v826 = vxor.u32 %v825, 2147483648
    %v827 = vmul.f32 %v826, 1.442695
    %v828 = vpow.pop %v827
    %v829 = vadd.f32 %v828, 1.0
    %v830 = vrcp.pop %v829
    %v831 = vmul.f32 1.0, %v830
    %v832 = vadd.f32 %v823, %v777
    %v833 = vxor.u32 %v832, 2147483648
    %v834 = vmul.f32 %v833, 1.442695
    %v835 = vpow.pop %v834
    %v836 = vadd.f32 %v835, 1.0
    %v837 = vrcp.pop %v836
    %v838 = vmul.f32 1.0, %v837
    %v839 = vmul.f32 %v831, %v816
    %v840 = vadd.f32 %v824, %v839
    %v841 = vtanh.pop %v840
    %v842 = vsub.f32 1.0, %v838
    %v843 = vmul.f32 %v842, %v841
    %v844 = vmul.f32 %v838, %v737
    %v845 = vadd.f32 %v843, %v844
    %s846 = scalar_lea.vmem [#allocation3], 8
    %847 = vst [vmem:[%s846] sm:$0xff] %v845
    %v848 = vpack.c.bf16 %v845, %v845
    %849 = vmatprep.subr.bf16.mxu0 %v586
    %850 = vmatpush1.bf16.msra.mxu0 %v585
    %851 = vmatprep.subr.bf16.mxu0 %v589
    %852 = vmatpush1.bf16.msra.mxu0 %v588
    %853 = vmatprep.subr.bf16.mxu0 %v592
    %854 = vmatpush1.bf16.msra.mxu0 %v591
    %855 = vmatprep.subr.bf16.mxu0 %v595
    %856 = vmatpush1.bf16.msra.mxu0 %v594
    %857 = vmatprep.subr.bf16.mxu0 %v598
    %858 = vmatpush1.bf16.msra.mxu0 %v597
    %859 = vmatprep.subr.bf16.mxu0 %v601
    %860 = vmatpush1.bf16.msra.mxu0 %v600
    %861 = vmatprep.subr.bf16.mxu0 %v604
    %862 = vmatpush1.bf16.msra.mxu0 %v603
    %863 = vmatprep.subr.bf16.mxu0 %v607
    %864 = vmatpush1.bf16.msra.mxu0 %v606
    %865 = vmatprep.subr.bf16.mxu0 0
    %866 = vmatpush1.bf16.msra.mxu0 0
    %867 = vmatprep.subr.bf16.mxu0 0
    %868 = vmatpush1.bf16.msra.mxu0 0
    %869 = vmatprep.subr.bf16.mxu0 0
    %870 = vmatpush1.bf16.msra.mxu0 0
    %871 = vmatprep.subr.bf16.mxu0 0
    %872 = vmatpush1.bf16.msra.mxu0 0
    %873 = vmatprep.subr.bf16.mxu0 0
    %874 = vmatpush1.bf16.msra.mxu0 0
    %875 = vmatprep.subr.bf16.mxu0 0
    %876 = vmatpush1.bf16.msra.mxu0 0
    %877 = vmatprep.subr.bf16.mxu0 0
    %878 = vmatpush1.bf16.msra.mxu0 0
    %879 = vmatprep.subr.bf16.mxu0 0
    %880 = vmatpush1.bf16.msra.mxu0 0
    %881 = vmatprep.mubr.bf16.mxu0 0
    %882 = vmatmul.mubr.bf16.gmra.mrb[0].mxu0 %v848
    %v883 = vpop.f32.mrb[0].mxu0
    %v884 = vadd.f32 %v493, %v883
    %v885 = vpop.f32.mrb[0].mxu0
    %v886 = vadd.f32 %v497, %v885
    %v887 = vpop.f32.mrb[0].mxu0
    %v888 = vpop.f32.mrb[0].mxu0
    %889 = vdwg.mxu0
    %890 = vmatprep.subr.bf16.mxu0 0
    %891 = vmatpush1.bf16.msra.mxu0 %v587
    %892 = vmatprep.subr.bf16.mxu0 0
    %893 = vmatpush1.bf16.msra.mxu0 %v590
    %894 = vmatprep.subr.bf16.mxu0 0
    %895 = vmatpush1.bf16.msra.mxu0 %v593
    %896 = vmatprep.subr.bf16.mxu0 0
    %897 = vmatpush1.bf16.msra.mxu0 %v596
    %898 = vmatprep.subr.bf16.mxu0 0
    %899 = vmatpush1.bf16.msra.mxu0 %v599
    %900 = vmatprep.subr.bf16.mxu0 0
    %901 = vmatpush1.bf16.msra.mxu0 %v602
    %902 = vmatprep.subr.bf16.mxu0 0
    %903 = vmatpush1.bf16.msra.mxu0 %v605
    %904 = vmatprep.subr.bf16.mxu0 0
    %905 = vmatpush1.bf16.msra.mxu0 %v608
    %906 = vmatprep.subr.bf16.mxu0 0
    %907 = vmatpush1.bf16.msra.mxu0 0
    %908 = vmatprep.subr.bf16.mxu0 0
    %909 = vmatpush1.bf16.msra.mxu0 0
    %910 = vmatprep.subr.bf16.mxu0 0
    %911 = vmatpush1.bf16.msra.mxu0 0
    %912 = vmatprep.subr.bf16.mxu0 0
    %913 = vmatpush1.bf16.msra.mxu0 0
    %914 = vmatprep.subr.bf16.mxu0 0
    %915 = vmatpush1.bf16.msra.mxu0 0
    %916 = vmatprep.subr.bf16.mxu0 0
    %917 = vmatpush1.bf16.msra.mxu0 0
    %918 = vmatprep.subr.bf16.mxu0 0
    %919 = vmatpush1.bf16.msra.mxu0 0
    %920 = vmatprep.subr.bf16.mxu0 0
    %921 = vmatpush1.bf16.msra.mxu0 0
    %922 = vmatprep.mubr.bf16.mxu0 0
    %923 = vmatmul.mubr.bf16.gmra.mrb[0].mxu0 %v848
    %v924 = vpop.f32.mrb[0].mxu0
    %v925 = vadd.f32 %v501, %v924
    %v926 = vpop.f32.mrb[0].mxu0
    %v927 = vpop.f32.mrb[0].mxu0
    %v928 = vpop.f32.mrb[0].mxu0
    %929 = vdwg.mxu0
    %s930 = scalar_lea.vmem [#allocation2], 48
    %v931 = vld [vmem:[%s930] sm:$0xff]
    %v932 = vld [vmem:[%s930 + $0x8] sm:$0xff]
    %v933 = vld [vmem:[%s930 + $0x10] sm:$0xff]
    %v934 = vadd.f32 %v931, %v884
    %v935 = vxor.u32 %v934, 2147483648
    %v936 = vmul.f32 %v935, 1.442695
    %v937 = vpow.pop %v936
    %v938 = vadd.f32 %v937, 1.0
    %v939 = vrcp.pop %v938
    %v940 = vmul.f32 1.0, %v939
    %v941 = vadd.f32 %v932, %v886
    %v942 = vxor.u32 %v941, 2147483648
    %v943 = vmul.f32 %v942, 1.442695
    %v944 = vpow.pop %v943
    %v945 = vadd.f32 %v944, 1.0
    %v946 = vrcp.pop %v945
    %v947 = vmul.f32 1.0, %v946
    %v948 = vmul.f32 %v940, %v925
    %v949 = vadd.f32 %v933, %v948
    %v950 = vtanh.pop %v949
    %v951 = vsub.f32 1.0, %v947
    %v952 = vmul.f32 %v951, %v950
    %v953 = vmul.f32 %v947, %v845
    %v954 = vadd.f32 %v952, %v953
    %s955 = scalar_lea.vmem [#allocation3], 16
    %956 = vst [vmem:[%s955] sm:$0xff] %v954
    %v957 = vpack.c.bf16 %v954, %v954
    %958 = vmatprep.subr.bf16.mxu0 %v586
    %959 = vmatpush1.bf16.msra.mxu0 %v585
    %960 = vmatprep.subr.bf16.mxu0 %v589
    %961 = vmatpush1.bf16.msra.mxu0 %v588
    %962 = vmatprep.subr.bf16.mxu0 %v592
    %963 = vmatpush1.bf16.msra.mxu0 %v591
    %964 = vmatprep.subr.bf16.mxu0 %v595
    %965 = vmatpush1.bf16.msra.mxu0 %v594
    %966 = vmatprep.subr.bf16.mxu0 %v598
    %967 = vmatpush1.bf16.msra.mxu0 %v597
    %968 = vmatprep.subr.bf16.mxu0 %v601
    %969 = vmatpush1.bf16.msra.mxu0 %v600
    %970 = vmatprep.subr.bf16.mxu0 %v604
    %971 = vmatpush1.bf16.msra.mxu0 %v603
    %972 = vmatprep.subr.bf16.mxu0 %v607
    %973 = vmatpush1.bf16.msra.mxu0 %v606
    %974 = vmatprep.subr.bf16.mxu0 0
    %975 = vmatpush1.bf16.msra.mxu0 0
    %976 = vmatprep.subr.bf16.mxu0 0
    %977 = vmatpush1.bf16.msra.mxu0 0
    %978 = vmatprep.subr.bf16.mxu0 0
    %979 = vmatpush1.bf16.msra.mxu0 0
    %980 = vmatprep.subr.bf16.mxu0 0
    %981 = vmatpush1.bf16.msra.mxu0 0
    %982 = vmatprep.subr.bf16.mxu0 0
    %983 = vmatpush1.bf16.msra.mxu0 0
    %984 = vmatprep.subr.bf16.mxu0 0
    %985 = vmatpush1.bf16.msra.mxu0 0
    %986 = vmatprep.subr.bf16.mxu0 0
    %987 = vmatpush1.bf16.msra.mxu0 0
    %988 = vmatprep.subr.bf16.mxu0 0
    %989 = vmatpush1.bf16.msra.mxu0 0
    %990 = vmatprep.mubr.bf16.mxu0 0
    %991 = vmatmul.mubr.bf16.gmra.mrb[0].mxu0 %v957
    %v992 = vpop.f32.mrb[0].mxu0
    %v993 = vadd.f32 %v493, %v992
    %v994 = vpop.f32.mrb[0].mxu0
    %v995 = vadd.f32 %v497, %v994
    %v996 = vpop.f32.mrb[0].mxu0
    %v997 = vpop.f32.mrb[0].mxu0
    %998 = vdwg.mxu0
    %999 = vmatprep.subr.bf16.mxu0 0
    %1000 = vmatpush1.bf16.msra.mxu0 %v587
    %1001 = vmatprep.subr.bf16.mxu0 0
    %1002 = vmatpush1.bf16.msra.mxu0 %v590
    %1003 = vmatprep.subr.bf16.mxu0 0
    %1004 = vmatpush1.bf16.msra.mxu0 %v593
    %1005 = vmatprep.subr.bf16.mxu0 0
    %1006 = vmatpush1.bf16.msra.mxu0 %v596
    %1007 = vmatprep.subr.bf16.mxu0 0
    %1008 = vmatpush1.bf16.msra.mxu0 %v599
    %1009 = vmatprep.subr.bf16.mxu0 0
    %1010 = vmatpush1.bf16.msra.mxu0 %v602
    %1011 = vmatprep.subr.bf16.mxu0 0
    %1012 = vmatpush1.bf16.msra.mxu0 %v605
    %1013 = vmatprep.subr.bf16.mxu0 0
    %1014 = vmatpush1.bf16.msra.mxu0 %v608
    %1015 = vmatprep.subr.bf16.mxu0 0
    %1016 = vmatpush1.bf16.msra.mxu0 0
    %1017 = vmatprep.subr.bf16.mxu0 0
    %1018 = vmatpush1.bf16.msra.mxu0 0
    %1019 = vmatprep.subr.bf16.mxu0 0
    %1020 = vmatpush1.bf16.msra.mxu0 0
    %1021 = vmatprep.subr.bf16.mxu0 0
    %1022 = vmatpush1.bf16.msra.mxu0 0
    %1023 = vmatprep.subr.bf16.mxu0 0
    %1024 = vmatpush1.bf16.msra.mxu0 0
    %1025 = vmatprep.subr.bf16.mxu0 0
    %1026 = vmatpush1.bf16.msra.mxu0 0
    %1027 = vmatprep.subr.bf16.mxu0 0
    %1028 = vmatpush1.bf16.msra.mxu0 0
    %1029 = vmatprep.subr.bf16.mxu0 0
    %1030 = vmatpush1.bf16.msra.mxu0 0
    %1031 = vmatprep.mubr.bf16.mxu0 0
    %1032 = vmatmul.mubr.bf16.gmra.mrb[0].mxu0 %v957
    %v1033 = vpop.f32.mrb[0].mxu0
    %v1034 = vadd.f32 %v501, %v1033
    %v1035 = vpop.f32.mrb[0].mxu0
    %v1036 = vpop.f32.mrb[0].mxu0
    %v1037 = vpop.f32.mrb[0].mxu0
    %1038 = vdwg.mxu0
    %s1039 = scalar_lea.vmem [#allocation2], 72
    %v1040 = vld [vmem:[%s1039] sm:$0xff]
    %v1041 = vld [vmem:[%s1039 + $0x8] sm:$0xff]
    %v1042 = vld [vmem:[%s1039 + $0x10] sm:$0xff]
    %v1043 = vadd.f32 %v1040, %v993
    %v1044 = vxor.u32 %v1043, 2147483648
    %v1045 = vmul.f32 %v1044, 1.442695
    %v1046 = vpow.pop %v1045
    %v1047 = vadd.f32 %v1046, 1.0
    %v1048 = vrcp.pop %v1047
    %v1049 = vmul.f32 1.0, %v1048
    %v1050 = vadd.f32 %v1041, %v995
    %v1051 = vxor.u32 %v1050, 2147483648
    %v1052 = vmul.f32 %v1051, 1.442695
    %v1053 = vpow.pop %v1052
    %v1054 = vadd.f32 %v1053, 1.0
    %v1055 = vrcp.pop %v1054
    %v1056 = vmul.f32 1.0, %v1055
    %v1057 = vmul.f32 %v1049, %v1034
    %v1058 = vadd.f32 %v1042, %v1057
    %v1059 = vtanh.pop %v1058
    %v1060 = vsub.f32 1.0, %v1056
    %v1061 = vmul.f32 %v1060, %v1059
    %v1062 = vmul.f32 %v1056, %v954
    %v1063 = vadd.f32 %v1061, %v1062
    %s1064 = scalar_lea.vmem [#allocation3], 24
    %1065 = vst [vmem:[%s1064] sm:$0xff] %v1063
    %v1066 = vpack.c.bf16 %v1063, %v1063
    %1067 = vmatprep.subr.bf16.mxu0 %v586
    %1068 = vmatpush1.bf16.msra.mxu0 %v585
    %1069 = vmatprep.subr.bf16.mxu0 %v589
    %1070 = vmatpush1.bf16.msra.mxu0 %v588
    %1071 = vmatprep.subr.bf16.mxu0 %v592
    %1072 = vmatpush1.bf16.msra.mxu0 %v591
    %1073 = vmatprep.subr.bf16.mxu0 %v595
    %1074 = vmatpush1.bf16.msra.mxu0 %v594
    %1075 = vmatprep.subr.bf16.mxu0 %v598
    %1076 = vmatpush1.bf16.msra.mxu0 %v597
    %1077 = vmatprep.subr.bf16.mxu0 %v601
    %1078 = vmatpush1.bf16.msra.mxu0 %v600
    %1079 = vmatprep.subr.bf16.mxu0 %v604
    %1080 = vmatpush1.bf16.msra.mxu0 %v603
    %1081 = vmatprep.subr.bf16.mxu0 %v607
    %1082 = vmatpush1.bf16.msra.mxu0 %v606
    %1083 = vmatprep.subr.bf16.mxu0 0
    %1084 = vmatpush1.bf16.msra.mxu0 0
    %1085 = vmatprep.subr.bf16.mxu0 0
    %1086 = vmatpush1.bf16.msra.mxu0 0
    %1087 = vmatprep.subr.bf16.mxu0 0
    %1088 = vmatpush1.bf16.msra.mxu0 0
    %1089 = vmatprep.subr.bf16.mxu0 0
    %1090 = vmatpush1.bf16.msra.mxu0 0
    %1091 = vmatprep.subr.bf16.mxu0 0
    %1092 = vmatpush1.bf16.msra.mxu0 0
    %1093 = vmatprep.subr.bf16.mxu0 0
    %1094 = vmatpush1.bf16.msra.mxu0 0
    %1095 = vmatprep.subr.bf16.mxu0 0
    %1096 = vmatpush1.bf16.msra.mxu0 0
    %1097 = vmatprep.subr.bf16.mxu0 0
    %1098 = vmatpush1.bf16.msra.mxu0 0
    %1099 = vmatprep.mubr.bf16.mxu0 0
    %1100 = vmatmul.mubr.bf16.gmra.mrb[0].mxu0 %v1066
    %v1101 = vpop.f32.mrb[0].mxu0
    %v1102 = vadd.f32 %v493, %v1101
    %v1103 = vpop.f32.mrb[0].mxu0
    %v1104 = vadd.f32 %v497, %v1103
    %v1105 = vpop.f32.mrb[0].mxu0
    %v1106 = vpop.f32.mrb[0].mxu0
    %1107 = vdwg.mxu0
    %1108 = vmatprep.subr.bf16.mxu0 0
    %1109 = vmatpush1.bf16.msra.mxu0 %v587
    %1110 = vmatprep.subr.bf16.mxu0 0
    %1111 = vmatpush1.bf16.msra.mxu0 %v590
    %1112 = vmatprep.subr.bf16.mxu0 0
    %1113 = vmatpush1.bf16.msra.mxu0 %v593
    %1114 = vmatprep.subr.bf16.mxu0 0
    %1115 = vmatpush1.bf16.msra.mxu0 %v596
    %1116 = vmatprep.subr.bf16.mxu0 0
    %1117 = vmatpush1.bf16.msra.mxu0 %v599
    %1118 = vmatprep.subr.bf16.mxu0 0
    %1119 = vmatpush1.bf16.msra.mxu0 %v602
    %1120 = vmatprep.subr.bf16.mxu0 0
    %1121 = vmatpush1.bf16.msra.mxu0 %v605
    %1122 = vmatprep.subr.bf16.mxu0 0
    %1123 = vmatpush1.bf16.msra.mxu0 %v608
    %1124 = vmatprep.subr.bf16.mxu0 0
    %1125 = vmatpush1.bf16.msra.mxu0 0
    %1126 = vmatprep.subr.bf16.mxu0 0
    %1127 = vmatpush1.bf16.msra.mxu0 0
    %1128 = vmatprep.subr.bf16.mxu0 0
    %1129 = vmatpush1.bf16.msra.mxu0 0
    %1130 = vmatprep.subr.bf16.mxu0 0
    %1131 = vmatpush1.bf16.msra.mxu0 0
    %1132 = vmatprep.subr.bf16.mxu0 0
    %1133 = vmatpush1.bf16.msra.mxu0 0
    %1134 = vmatprep.subr.bf16.mxu0 0
    %1135 = vmatpush1.bf16.msra.mxu0 0
    %1136 = vmatprep.subr.bf16.mxu0 0
    %1137 = vmatpush1.bf16.msra.mxu0 0
    %1138 = vmatprep.subr.bf16.mxu0 0
    %1139 = vmatpush1.bf16.msra.mxu0 0
    %1140 = vmatprep.mubr.bf16.mxu0 0
    %1141 = vmatmul.mubr.bf16.gmra.mrb[0].mxu0 %v1066
    %v1142 = vpop.f32.mrb[0].mxu0
    %v1143 = vadd.f32 %v501, %v1142
    %v1144 = vpop.f32.mrb[0].mxu0
    %v1145 = vpop.f32.mrb[0].mxu0
    %v1146 = vpop.f32.mrb[0].mxu0
    %1147 = vdwg.mxu0
    %s1148 = scalar_lea.vmem [#allocation2], 96
    %v1149 = vld [vmem:[%s1148] sm:$0xff]
    %v1150 = vld [vmem:[%s1148 + $0x8] sm:$0xff]
    %v1151 = vld [vmem:[%s1148 + $0x10] sm:$0xff]
    %v1152 = vadd.f32 %v1149, %v1102
    %v1153 = vxor.u32 %v1152, 2147483648
    %v1154 = vmul.f32 %v1153, 1.442695
    %v1155 = vpow.pop %v1154
    %v1156 = vadd.f32 %v1155, 1.0
    %v1157 = vrcp.pop %v1156
    %v1158 = vmul.f32 1.0, %v1157
    %v1159 = vadd.f32 %v1150, %v1104
    %v1160 = vxor.u32 %v1159, 2147483648
    %v1161 = vmul.f32 %v1160, 1.442695
    %v1162 = vpow.pop %v1161
    %v1163 = vadd.f32 %v1162, 1.0
    %v1164 = vrcp.pop %v1163
    %v1165 = vmul.f32 1.0, %v1164
    %v1166 = vmul.f32 %v1158, %v1143
    %v1167 = vadd.f32 %v1151, %v1166
    %v1168 = vtanh.pop %v1167
    %v1169 = vsub.f32 1.0, %v1165
    %v1170 = vmul.f32 %v1169, %v1168
    %v1171 = vmul.f32 %v1165, %v1063
    %v1172 = vadd.f32 %v1170, %v1171
    %s1173 = scalar_lea.vmem [#allocation3], 32
    %1174 = vst [vmem:[%s1173] sm:$0xff] %v1172
    %v1175 = vpack.c.bf16 %v1172, %v1172
    %1176 = vmatprep.subr.bf16.mxu0 %v586
    %1177 = vmatpush1.bf16.msra.mxu0 %v585
    %1178 = vmatprep.subr.bf16.mxu0 %v589
    %1179 = vmatpush1.bf16.msra.mxu0 %v588
    %1180 = vmatprep.subr.bf16.mxu0 %v592
    %1181 = vmatpush1.bf16.msra.mxu0 %v591
    %1182 = vmatprep.subr.bf16.mxu0 %v595
    %1183 = vmatpush1.bf16.msra.mxu0 %v594
    %1184 = vmatprep.subr.bf16.mxu0 %v598
    %1185 = vmatpush1.bf16.msra.mxu0 %v597
    %1186 = vmatprep.subr.bf16.mxu0 %v601
    %1187 = vmatpush1.bf16.msra.mxu0 %v600
    %1188 = vmatprep.subr.bf16.mxu0 %v604
    %1189 = vmatpush1.bf16.msra.mxu0 %v603
    %1190 = vmatprep.subr.bf16.mxu0 %v607
    %1191 = vmatpush1.bf16.msra.mxu0 %v606
    %1192 = vmatprep.subr.bf16.mxu0 0
    %1193 = vmatpush1.bf16.msra.mxu0 0
    %1194 = vmatprep.subr.bf16.mxu0 0
    %1195 = vmatpush1.bf16.msra.mxu0 0
    %1196 = vmatprep.subr.bf16.mxu0 0
    %1197 = vmatpush1.bf16.msra.mxu0 0
    %1198 = vmatprep.subr.bf16.mxu0 0
    %1199 = vmatpush1.bf16.msra.mxu0 0
    %1200 = vmatprep.subr.bf16.mxu0 0
    %1201 = vmatpush1.bf16.msra.mxu0 0
    %1202 = vmatprep.subr.bf16.mxu0 0
    %1203 = vmatpush1.bf16.msra.mxu0 0
    %1204 = vmatprep.subr.bf16.mxu0 0
    %1205 = vmatpush1.bf16.msra.mxu0 0
    %1206 = vmatprep.subr.bf16.mxu0 0
    %1207 = vmatpush1.bf16.msra.mxu0 0
    %1208 = vmatprep.mubr.bf16.mxu0 0
    %1209 = vmatmul.mubr.bf16.gmra.mrb[0].mxu0 %v1175
    %v1210 = vpop.f32.mrb[0].mxu0
    %v1211 = vadd.f32 %v493, %v1210
    %v1212 = vpop.f32.mrb[0].mxu0
    %v1213 = vadd.f32 %v497, %v1212
    %v1214 = vpop.f32.mrb[0].mxu0
    %v1215 = vpop.f32.mrb[0].mxu0
    %1216 = vdwg.mxu0
    %1217 = vmatprep.subr.bf16.mxu0 0
    %1218 = vmatpush1.bf16.msra.mxu0 %v587
    %1219 = vmatprep.subr.bf16.mxu0 0
    %1220 = vmatpush1.bf16.msra.mxu0 %v590
    %1221 = vmatprep.subr.bf16.mxu0 0
    %1222 = vmatpush1.bf16.msra.mxu0 %v593
    %1223 = vmatprep.subr.bf16.mxu0 0
    %1224 = vmatpush1.bf16.msra.mxu0 %v596
    %1225 = vmatprep.subr.bf16.mxu0 0
    %1226 = vmatpush1.bf16.msra.mxu0 %v599
    %1227 = vmatprep.subr.bf16.mxu0 0
    %1228 = vmatpush1.bf16.msra.mxu0 %v602
    %1229 = vmatprep.subr.bf16.mxu0 0
    %1230 = vmatpush1.bf16.msra.mxu0 %v605
    %1231 = vmatprep.subr.bf16.mxu0 0
    %1232 = vmatpush1.bf16.msra.mxu0 %v608
    %1233 = vmatprep.subr.bf16.mxu0 0
    %1234 = vmatpush1.bf16.msra.mxu0 0
    %1235 = vmatprep.subr.bf16.mxu0 0
    %1236 = vmatpush1.bf16.msra.mxu0 0
    %1237 = vmatprep.subr.bf16.mxu0 0
    %1238 = vmatpush1.bf16.msra.mxu0 0
    %1239 = vmatprep.subr.bf16.mxu0 0
    %1240 = vmatpush1.bf16.msra.mxu0 0
    %1241 = vmatprep.subr.bf16.mxu0 0
    %1242 = vmatpush1.bf16.msra.mxu0 0
    %1243 = vmatprep.subr.bf16.mxu0 0
    %1244 = vmatpush1.bf16.msra.mxu0 0
    %1245 = vmatprep.subr.bf16.mxu0 0
    %1246 = vmatpush1.bf16.msra.mxu0 0
    %1247 = vmatprep.subr.bf16.mxu0 0
    %1248 = vmatpush1.bf16.msra.mxu0 0
    %1249 = vmatprep.mubr.bf16.mxu0 0
    %1250 = vmatmul.mubr.bf16.gmra.mrb[0].mxu0 %v1175
    %v1251 = vpop.f32.mrb[0].mxu0
    %v1252 = vadd.f32 %v501, %v1251
    %v1253 = vpop.f32.mrb[0].mxu0
    %v1254 = vpop.f32.mrb[0].mxu0
    %v1255 = vpop.f32.mrb[0].mxu0
    %1256 = vdwg.mxu0
    %s1257 = scalar_lea.vmem [#allocation2], 120
    %v1258 = vld [vmem:[%s1257] sm:$0xff]
    %v1259 = vld [vmem:[%s1257 + $0x8] sm:$0xff]
    %v1260 = vld [vmem:[%s1257 + $0x10] sm:$0xff]
    %v1261 = vadd.f32 %v1258, %v1211
    %v1262 = vxor.u32 %v1261, 2147483648
    %v1263 = vmul.f32 %v1262, 1.442695
    %v1264 = vpow.pop %v1263
    %v1265 = vadd.f32 %v1264, 1.0
    %v1266 = vrcp.pop %v1265
    %v1267 = vmul.f32 1.0, %v1266
    %v1268 = vadd.f32 %v1259, %v1213
    %v1269 = vxor.u32 %v1268, 2147483648
    %v1270 = vmul.f32 %v1269, 1.442695
    %v1271 = vpow.pop %v1270
    %v1272 = vadd.f32 %v1271, 1.0
    %v1273 = vrcp.pop %v1272
    %v1274 = vmul.f32 1.0, %v1273
    %v1275 = vmul.f32 %v1267, %v1252
    %v1276 = vadd.f32 %v1260, %v1275
    %v1277 = vtanh.pop %v1276
    %v1278 = vsub.f32 1.0, %v1274
    %v1279 = vmul.f32 %v1278, %v1277
    %v1280 = vmul.f32 %v1274, %v1172
    %v1281 = vadd.f32 %v1279, %v1280
    %s1282 = scalar_lea.vmem [#allocation3], 40
    %1283 = vst [vmem:[%s1282] sm:$0xff] %v1281
    %v1284 = vpack.c.bf16 %v1281, %v1281
    %1285 = vmatprep.subr.bf16.mxu0 %v586
    %1286 = vmatpush1.bf16.msra.mxu0 %v585
    %1287 = vmatprep.subr.bf16.mxu0 %v589
    %1288 = vmatpush1.bf16.msra.mxu0 %v588
    %1289 = vmatprep.subr.bf16.mxu0 %v592
    %1290 = vmatpush1.bf16.msra.mxu0 %v591
    %1291 = vmatprep.subr.bf16.mxu0 %v595
    %1292 = vmatpush1.bf16.msra.mxu0 %v594
    %1293 = vmatprep.subr.bf16.mxu0 %v598
    %1294 = vmatpush1.bf16.msra.mxu0 %v597
    %1295 = vmatprep.subr.bf16.mxu0 %v601
    %1296 = vmatpush1.bf16.msra.mxu0 %v600
    %1297 = vmatprep.subr.bf16.mxu0 %v604
    %1298 = vmatpush1.bf16.msra.mxu0 %v603
    %1299 = vmatprep.subr.bf16.mxu0 %v607
    %1300 = vmatpush1.bf16.msra.mxu0 %v606
    %1301 = vmatprep.subr.bf16.mxu0 0
    %1302 = vmatpush1.bf16.msra.mxu0 0
    %1303 = vmatprep.subr.bf16.mxu0 0
    %1304 = vmatpush1.bf16.msra.mxu0 0
    %1305 = vmatprep.subr.bf16.mxu0 0
    %1306 = vmatpush1.bf16.msra.mxu0 0
    %1307 = vmatprep.subr.bf16.mxu0 0
    %1308 = vmatpush1.bf16.msra.mxu0 0
    %1309 = vmatprep.subr.bf16.mxu0 0
    %1310 = vmatpush1.bf16.msra.mxu0 0
    %1311 = vmatprep.subr.bf16.mxu0 0
    %1312 = vmatpush1.bf16.msra.mxu0 0
    %1313 = vmatprep.subr.bf16.mxu0 0
    %1314 = vmatpush1.bf16.msra.mxu0 0
    %1315 = vmatprep.subr.bf16.mxu0 0
    %1316 = vmatpush1.bf16.msra.mxu0 0
    %1317 = vmatprep.mubr.bf16.mxu0 0
    %1318 = vmatmul.mubr.bf16.gmra.mrb[0].mxu0 %v1284
    %v1319 = vpop.f32.mrb[0].mxu0
    %v1320 = vadd.f32 %v493, %v1319
    %v1321 = vpop.f32.mrb[0].mxu0
    %v1322 = vadd.f32 %v497, %v1321
    %v1323 = vpop.f32.mrb[0].mxu0
    %v1324 = vpop.f32.mrb[0].mxu0
    %1325 = vdwg.mxu0
    %1326 = vmatprep.subr.bf16.mxu0 0
    %1327 = vmatpush1.bf16.msra.mxu0 %v587
    %1328 = vmatprep.subr.bf16.mxu0 0
    %1329 = vmatpush1.bf16.msra.mxu0 %v590
    %1330 = vmatprep.subr.bf16.mxu0 0
    %1331 = vmatpush1.bf16.msra.mxu0 %v593
    %1332 = vmatprep.subr.bf16.mxu0 0
    %1333 = vmatpush1.bf16.msra.mxu0 %v596
    %1334 = vmatprep.subr.bf16.mxu0 0
    %1335 = vmatpush1.bf16.msra.mxu0 %v599
    %1336 = vmatprep.subr.bf16.mxu0 0
    %1337 = vmatpush1.bf16.msra.mxu0 %v602
    %1338 = vmatprep.subr.bf16.mxu0 0
    %1339 = vmatpush1.bf16.msra.mxu0 %v605
    %1340 = vmatprep.subr.bf16.mxu0 0
    %1341 = vmatpush1.bf16.msra.mxu0 %v608
    %1342 = vmatprep.subr.bf16.mxu0 0
    %1343 = vmatpush1.bf16.msra.mxu0 0
    %1344 = vmatprep.subr.bf16.mxu0 0
    %1345 = vmatpush1.bf16.msra.mxu0 0
    %1346 = vmatprep.subr.bf16.mxu0 0
    %1347 = vmatpush1.bf16.msra.mxu0 0
    %1348 = vmatprep.subr.bf16.mxu0 0
    %1349 = vmatpush1.bf16.msra.mxu0 0
    %1350 = vmatprep.subr.bf16.mxu0 0
    %1351 = vmatpush1.bf16.msra.mxu0 0
    %1352 = vmatprep.subr.bf16.mxu0 0
    %1353 = vmatpush1.bf16.msra.mxu0 0
    %1354 = vmatprep.subr.bf16.mxu0 0
    %1355 = vmatpush1.bf16.msra.mxu0 0
    %1356 = vmatprep.subr.bf16.mxu0 0
    %1357 = vmatpush1.bf16.msra.mxu0 0
    %1358 = vmatprep.mubr.bf16.mxu0 0
    %1359 = vmatmul.mubr.bf16.gmra.mrb[0].mxu0 %v1284
    %v1360 = vpop.f32.mrb[0].mxu0
    %v1361 = vadd.f32 %v501, %v1360
    %v1362 = vpop.f32.mrb[0].mxu0
    %v1363 = vpop.f32.mrb[0].mxu0
    %v1364 = vpop.f32.mrb[0].mxu0
    %1365 = vdwg.mxu0
    %s1366 = scalar_lea.vmem [#allocation2], 144
    %v1367 = vld [vmem:[%s1366] sm:$0xff]
    %v1368 = vld [vmem:[%s1366 + $0x8] sm:$0xff]
    %v1369 = vld [vmem:[%s1366 + $0x10] sm:$0xff]
    %v1370 = vadd.f32 %v1367, %v1320
    %v1371 = vxor.u32 %v1370, 2147483648
    %v1372 = vmul.f32 %v1371, 1.442695
    %v1373 = vpow.pop %v1372
    %v1374 = vadd.f32 %v1373, 1.0
    %v1375 = vrcp.pop %v1374
    %v1376 = vmul.f32 1.0, %v1375
    %v1377 = vadd.f32 %v1368, %v1322
    %v1378 = vxor.u32 %v1377, 2147483648
    %v1379 = vmul.f32 %v1378, 1.442695
    %v1380 = vpow.pop %v1379
    %v1381 = vadd.f32 %v1380, 1.0
    %v1382 = vrcp.pop %v1381
    %v1383 = vmul.f32 1.0, %v1382
    %v1384 = vmul.f32 %v1376, %v1361
    %v1385 = vadd.f32 %v1369, %v1384
    %v1386 = vtanh.pop %v1385
    %v1387 = vsub.f32 1.0, %v1383
    %v1388 = vmul.f32 %v1387, %v1386
    %v1389 = vmul.f32 %v1383, %v1281
    %v1390 = vadd.f32 %v1388, %v1389
    %s1391 = scalar_lea.vmem [#allocation3], 48
    %1392 = vst [vmem:[%s1391] sm:$0xff] %v1390
    %v1393 = vpack.c.bf16 %v1390, %v1390
    %1394 = vmatprep.subr.bf16.mxu0 %v586
    %1395 = vmatpush1.bf16.msra.mxu0 %v585
    %1396 = vmatprep.subr.bf16.mxu0 %v589
    %1397 = vmatpush1.bf16.msra.mxu0 %v588
    %1398 = vmatprep.subr.bf16.mxu0 %v592
    %1399 = vmatpush1.bf16.msra.mxu0 %v591
    %1400 = vmatprep.subr.bf16.mxu0 %v595
    %1401 = vmatpush1.bf16.msra.mxu0 %v594
    %1402 = vmatprep.subr.bf16.mxu0 %v598
    %1403 = vmatpush1.bf16.msra.mxu0 %v597
    %1404 = vmatprep.subr.bf16.mxu0 %v601
    %1405 = vmatpush1.bf16.msra.mxu0 %v600
    %1406 = vmatprep.subr.bf16.mxu0 %v604
    %1407 = vmatpush1.bf16.msra.mxu0 %v603
    %1408 = vmatprep.subr.bf16.mxu0 %v607
    %1409 = vmatpush1.bf16.msra.mxu0 %v606
    %1410 = vmatprep.subr.bf16.mxu0 0
    %1411 = vmatpush1.bf16.msra.mxu0 0
    %1412 = vmatprep.subr.bf16.mxu0 0
    %1413 = vmatpush1.bf16.msra.mxu0 0
    %1414 = vmatprep.subr.bf16.mxu0 0
    %1415 = vmatpush1.bf16.msra.mxu0 0
    %1416 = vmatprep.subr.bf16.mxu0 0
    %1417 = vmatpush1.bf16.msra.mxu0 0
    %1418 = vmatprep.subr.bf16.mxu0 0
    %1419 = vmatpush1.bf16.msra.mxu0 0
    %1420 = vmatprep.subr.bf16.mxu0 0
    %1421 = vmatpush1.bf16.msra.mxu0 0
    %1422 = vmatprep.subr.bf16.mxu0 0
    %1423 = vmatpush1.bf16.msra.mxu0 0
    %1424 = vmatprep.subr.bf16.mxu0 0
    %1425 = vmatpush1.bf16.msra.mxu0 0
    %1426 = vmatprep.mubr.bf16.mxu0 0
    %1427 = vmatmul.mubr.bf16.gmra.mrb[0].mxu0 %v1393
    %v1428 = vpop.f32.mrb[0].mxu0
    %v1429 = vadd.f32 %v493, %v1428
    %v1430 = vpop.f32.mrb[0].mxu0
    %v1431 = vadd.f32 %v497, %v1430
    %v1432 = vpop.f32.mrb[0].mxu0
    %v1433 = vpop.f32.mrb[0].mxu0
    %1434 = vdwg.mxu0
    %1435 = vmatprep.subr.bf16.mxu0 0
    %1436 = vmatpush1.bf16.msra.mxu0 %v587
    %1437 = vmatprep.subr.bf16.mxu0 0
    %1438 = vmatpush1.bf16.msra.mxu0 %v590
    %1439 = vmatprep.subr.bf16.mxu0 0
    %1440 = vmatpush1.bf16.msra.mxu0 %v593
    %1441 = vmatprep.subr.bf16.mxu0 0
    %1442 = vmatpush1.bf16.msra.mxu0 %v596
    %1443 = vmatprep.subr.bf16.mxu0 0
    %1444 = vmatpush1.bf16.msra.mxu0 %v599
    %1445 = vmatprep.subr.bf16.mxu0 0
    %1446 = vmatpush1.bf16.msra.mxu0 %v602
    %1447 = vmatprep.subr.bf16.mxu0 0
    %1448 = vmatpush1.bf16.msra.mxu0 %v605
    %1449 = vmatprep.subr.bf16.mxu0 0
    %1450 = vmatpush1.bf16.msra.mxu0 %v608
    %1451 = vmatprep.subr.bf16.mxu0 0
    %1452 = vmatpush1.bf16.msra.mxu0 0
    %1453 = vmatprep.subr.bf16.mxu0 0
    %1454 = vmatpush1.bf16.msra.mxu0 0
    %1455 = vmatprep.subr.bf16.mxu0 0
    %1456 = vmatpush1.bf16.msra.mxu0 0
    %1457 = vmatprep.subr.bf16.mxu0 0
    %1458 = vmatpush1.bf16.msra.mxu0 0
    %1459 = vmatprep.subr.bf16.mxu0 0
    %1460 = vmatpush1.bf16.msra.mxu0 0
    %1461 = vmatprep.subr.bf16.mxu0 0
    %1462 = vmatpush1.bf16.msra.mxu0 0
    %1463 = vmatprep.subr.bf16.mxu0 0
    %1464 = vmatpush1.bf16.msra.mxu0 0
    %1465 = vmatprep.subr.bf16.mxu0 0
    %1466 = vmatpush1.bf16.msra.mxu0 0
    %1467 = vmatprep.mubr.bf16.mxu0 0
    %1468 = vmatmul.mubr.bf16.gmra.mrb[0].mxu0 %v1393
    %v1469 = vpop.f32.mrb[0].mxu0
    %v1470 = vadd.f32 %v501, %v1469
    %v1471 = vpop.f32.mrb[0].mxu0
    %v1472 = vpop.f32.mrb[0].mxu0
    %v1473 = vpop.f32.mrb[0].mxu0
    %1474 = vdwg.mxu0
    %s1475 = scalar_lea.vmem [#allocation2], 168
    %v1476 = vld [vmem:[%s1475] sm:$0xff]
    %v1477 = vld [vmem:[%s1475 + $0x8] sm:$0xff]
    %v1478 = vld [vmem:[%s1475 + $0x10] sm:$0xff]
    %v1479 = vadd.f32 %v1476, %v1429
    %v1480 = vxor.u32 %v1479, 2147483648
    %v1481 = vmul.f32 %v1480, 1.442695
    %v1482 = vpow.pop %v1481
    %v1483 = vadd.f32 %v1482, 1.0
    %v1484 = vrcp.pop %v1483
    %v1485 = vmul.f32 1.0, %v1484
    %v1486 = vadd.f32 %v1477, %v1431
    %v1487 = vxor.u32 %v1486, 2147483648
    %v1488 = vmul.f32 %v1487, 1.442695
    %v1489 = vpow.pop %v1488
    %v1490 = vadd.f32 %v1489, 1.0
    %v1491 = vrcp.pop %v1490
    %v1492 = vmul.f32 1.0, %v1491
    %v1493 = vmul.f32 %v1485, %v1470
    %v1494 = vadd.f32 %v1478, %v1493
    %v1495 = vtanh.pop %v1494
    %v1496 = vsub.f32 1.0, %v1492
    %v1497 = vmul.f32 %v1496, %v1495
    %v1498 = vmul.f32 %v1492, %v1390
    %v1499 = vadd.f32 %v1497, %v1498
    %s1500 = scalar_lea.vmem [#allocation3], 56
    %1501 = vst [vmem:[%s1500] sm:$0xff] %v1499
    %1502 = vst [vmem:[%s9] sm:$0xff] %v1499
    %v1503 = vld [vmem:[#allocation3] sm:$0xff]
    %v1504 = vld [vmem:[#allocation3 + $0x8] sm:$0xff]
    %v1505 = vld [vmem:[#allocation3 + $0x10] sm:$0xff]
    %v1506 = vld [vmem:[#allocation3 + $0x18] sm:$0xff]
    %v1507 = vld [vmem:[#allocation3 + $0x20] sm:$0xff]
    %v1508 = vld [vmem:[#allocation3 + $0x28] sm:$0xff]
    %v1509 = vld [vmem:[#allocation3 + $0x30] sm:$0xff]
    %v1510 = vld [vmem:[#allocation3 + $0x38] sm:$0xff]
    %v1511 = vpack.c.bf16 %v1504, %v1503
    %v1512 = vpack.c.bf16 %v1506, %v1505
    %v1513 = vpack.c.bf16 %v1508, %v1507
    %v1514 = vpack.c.bf16 %v1510, %v1509
    %v1515 = vld [vmem:[#allocation9] sm:$0xf]
    %v1516 = vld [vmem:[#allocation9 + $0x4] sm:$0xf]
    %v1517 = vld [vmem:[#allocation9 + $0x8] sm:$0xf]
    %v1518 = vld [vmem:[#allocation9 + $0xc] sm:$0xf]
    %v1519 = vld [vmem:[#allocation9 + $0x10] sm:$0xf]
    %v1520 = vld [vmem:[#allocation9 + $0x14] sm:$0xf]
    %v1521 = vld [vmem:[#allocation9 + $0x18] sm:$0xf]
    %v1522 = vld [vmem:[#allocation9 + $0x1c] sm:$0xf]
    %v1523 = vld [vmem:[#allocation9 + $0x20] sm:$0xf]
    %v1524 = vld [vmem:[#allocation9 + $0x24] sm:$0xf]
    %v1525 = vld [vmem:[#allocation9 + $0x28] sm:$0xf]
    %v1526 = vld [vmem:[#allocation9 + $0x2c] sm:$0xf]
    %v1527 = vld [vmem:[#allocation9 + $0x30] sm:$0xf]
    %v1528 = vld [vmem:[#allocation9 + $0x34] sm:$0xf]
    %v1529 = vld [vmem:[#allocation9 + $0x38] sm:$0xf]
    %v1530 = vld [vmem:[#allocation9 + $0x3c] sm:$0xf]
    %v1531 = vld [vmem:[%s6] sm:$0x1]
    %v1533 = vlaneseq
    %v1534 = vshrl.u32 %v1533, 7
    %v1535 = vsub.s32 0, %v1534
    %v1536 = vrot.slane %v1531, %v1535
    %v1554 = vunpack.c.l.b16 %v1515
    %v1555 = vunpack.c.l.b16 %v1516
    %v1556 = vunpack.c.l.b16 %v1517
    %v1557 = vunpack.c.l.b16 %v1518
    %v1558 = vunpack.c.l.b16 %v1519
    %v1559 = vunpack.c.l.b16 %v1520
    %v1560 = vunpack.c.l.b16 %v1521
    %v1561 = vunpack.c.l.b16 %v1522
    %v1562 = vunpack.c.l.b16 %v1523
    %v1563 = vunpack.c.l.b16 %v1524
    %v1564 = vunpack.c.l.b16 %v1525
    %v1565 = vunpack.c.l.b16 %v1526
    %v1566 = vunpack.c.l.b16 %v1527
    %v1567 = vunpack.c.l.b16 %v1528
    %v1568 = vunpack.c.l.b16 %v1529
    %v1569 = vunpack.c.l.b16 %v1530
    %v1570 = vpack.c.b16 %v1555, %v1554
    %v1571 = vpack.c.b16 %v1557, %v1556
    %v1572 = vpack.c.b16 %v1559, %v1558
    %v1573 = vpack.c.b16 %v1561, %v1560
    %v1574 = vpack.c.b16 %v1563, %v1562
    %v1575 = vpack.c.b16 %v1565, %v1564
    %v1576 = vpack.c.b16 %v1567, %v1566
    %v1577 = vpack.c.b16 %v1569, %v1568
    %1586 = vmatprep.subr.bf16.mxu0 0
    %1587 = vmatpush1.bf16.msra.mxu0 %v1570
    %1588 = vmatprep.subr.bf16.mxu0 0
    %1589 = vmatpush1.bf16.msra.mxu0 %v1571
    %1590 = vmatprep.subr.bf16.mxu0 0
    %1591 = vmatpush1.bf16.msra.mxu0 %v1572
    %1592 = vmatprep.subr.bf16.mxu0 0
    %1593 = vmatpush1.bf16.msra.mxu0 %v1573
    %1594 = vmatprep.subr.bf16.mxu0 0
    %1595 = vmatpush1.bf16.msra.mxu0 %v1574
    %1596 = vmatprep.subr.bf16.mxu0 0
    %1597 = vmatpush1.bf16.msra.mxu0 %v1575
    %1598 = vmatprep.subr.bf16.mxu0 0
    %1599 = vmatpush1.bf16.msra.mxu0 %v1576
    %1600 = vmatprep.subr.bf16.mxu0 0
    %1601 = vmatpush1.bf16.msra.mxu0 %v1577
    %1602 = vmatprep.subr.bf16.mxu0 0
    %1603 = vmatpush1.bf16.msra.mxu0 0
    %1604 = vmatprep.subr.bf16.mxu0 0
    %1605 = vmatpush1.bf16.msra.mxu0 0
    %1606 = vmatprep.subr.bf16.mxu0 0
    %1607 = vmatpush1.bf16.msra.mxu0 0
    %1608 = vmatprep.subr.bf16.mxu0 0
    %1609 = vmatpush1.bf16.msra.mxu0 0
    %1610 = vmatprep.subr.bf16.mxu0 0
    %1611 = vmatpush1.bf16.msra.mxu0 0
    %1612 = vmatprep.subr.bf16.mxu0 0
    %1613 = vmatpush1.bf16.msra.mxu0 0
    %1614 = vmatprep.subr.bf16.mxu0 0
    %1615 = vmatpush1.bf16.msra.mxu0 0
    %1616 = vmatprep.subr.bf16.mxu0 0
    %1617 = vmatpush1.bf16.msra.mxu0 0
    %1618 = vmatprep.mubr.bf16.mxu0 0
    %1619 = vmatmul.mubr.bf16.gmra.mrb[0].mxu0 %v1511
    %v1620 = vpop.f32.mrb[0].mxu0
    %v1621 = vadd.f32 %v1536, %v1620
    %v1622 = vpop.f32.mrb[0].mxu0
    %v1623 = vpop.f32.mrb[0].mxu0
    %v1624 = vadd.f32 %v1536, %v1623
    %v1625 = vpop.f32.mrb[0].mxu0
    %1626 = vmatprep.mubr.bf16.mxu0 0
    %1627 = vmatmul.mubr.bf16.gmra.mrb[0].mxu0 %v1512
    %v1628 = vpop.f32.mrb[0].mxu0
    %v1629 = vadd.f32 %v1536, %v1628
    %v1630 = vpop.f32.mrb[0].mxu0
    %v1631 = vpop.f32.mrb[0].mxu0
    %v1632 = vadd.f32 %v1536, %v1631
    %v1633 = vpop.f32.mrb[0].mxu0
    %1634 = vmatprep.mubr.bf16.mxu0 0
    %1635 = vmatmul.mubr.bf16.gmra.mrb[0].mxu0 %v1513
    %v1636 = vpop.f32.mrb[0].mxu0
    %v1637 = vadd.f32 %v1536, %v1636
    %v1638 = vpop.f32.mrb[0].mxu0
    %v1639 = vpop.f32.mrb[0].mxu0
    %v1640 = vadd.f32 %v1536, %v1639
    %v1641 = vpop.f32.mrb[0].mxu0
    %1642 = vmatprep.mubr.bf16.mxu0 0
    %1643 = vmatmul.mubr.bf16.gmra.mrb[0].mxu0 %v1514
    %v1644 = vpop.f32.mrb[0].mxu0
    %v1645 = vadd.f32 %v1536, %v1644
    %v1646 = vpop.f32.mrb[0].mxu0
    %v1647 = vpop.f32.mrb[0].mxu0
    %v1648 = vadd.f32 %v1536, %v1647
    %v1649 = vpop.f32.mrb[0].mxu0
    %1650 = vdwg.mxu0
    %1651 = vst [vmem:[%s8] sm:$0xff] %v1621
    %1652 = vst [vmem:[%s8 + $0x8] sm:$0xff] %v1624
    %1653 = vst [vmem:[%s8 + $0x10] sm:$0xff] %v1629
    %1654 = vst [vmem:[%s8 + $0x18] sm:$0xff] %v1632
    %1655 = vst [vmem:[%s8 + $0x20] sm:$0xff] %v1637
    %1656 = vst [vmem:[%s8 + $0x28] sm:$0xff] %v1640
    %1657 = vst [vmem:[%s8 + $0x30] sm:$0xff] %v1645
    %1658 = vst [vmem:[%s8 + $0x38] sm:$0xff] %v1648
    // Predicated region
    $region50: #{char_rnn_forward.1} parent=1 // pred_check
      _
    $region51: #{char_rnn_forward.1} parent=1 // pred_check_branch
      %1660 = sbr.rel (0) target = $region53
    $region52: #{char_rnn_forward.1} parent=1 // pred_region
      _
    $region53: #{char_rnn_forward.1} parent=1 // pred_fallthru
      _
    // Predicated region
    $region54: #{char_rnn_forward.1} parent=1 // pred_check
      _
    $region55: #{char_rnn_forward.1} parent=1 // pred_check_branch
      %1662 = sbr.rel (0) target = $region57
    $region56: #{char_rnn_forward.1} parent=1 // pred_region
      _
    $region57: #{char_rnn_forward.1} parent=1 // pred_fallthru
      _
    // Predicated region
    $region58: #{char_rnn_forward.1} parent=1 // pred_check
      _
    $region59: #{char_rnn_forward.1} parent=1 // pred_check_branch
      %1664 = sbr.rel (0) target = $region61
    $region60: #{char_rnn_forward.1} parent=1 // pred_region
      _
    $region61: #{char_rnn_forward.1} parent=1 // pred_fallthru
      _
    // Predicated region
    $region62: #{char_rnn_forward.1} parent=1 // pred_check
      _
    $region63: #{char_rnn_forward.1} parent=1 // pred_check_branch
      %1666 = sbr.rel (0) target = $region65
    $region64: #{char_rnn_forward.1} parent=1 // pred_region
      _
    $region65: #{char_rnn_forward.1} parent=1 // pred_fallthru
      _
    %1667 = vsyncpa [#allocation5], 1
    %1668 = vsyncpa [#allocation7], 1
    %1669 = vsyncpa [#allocation10], 1

</llo_original>
